<compile_context>
chip_gen: v5e
topology: v5e:2x2
jax: 0.10.0
libtpu: 0.0.40
codegen_flags: <defaults>
</compile_context>

<pallas_src>
import functools

import jax
import jax.numpy as jnp
from jax import lax
from jax.experimental import pallas as pl
from jax.experimental.pallas import tpu as pltpu

EPS = 1e-5  # nn.InstanceNorm2d default eps (affine=False, no running stats)
_VMEM_LIMIT_BYTES = 64 * 1024 * 1024


def _compiler_params():
    return pltpu.CompilerParams(
        dimension_semantics=("parallel",),
        vmem_limit_bytes=_VMEM_LIMIT_BYTES,
    )


def _instance_norm(z):
    """z: (H*W, C) f32. Per-channel mean / biased var over spatial positions."""
    mean = jnp.mean(z, axis=0, keepdims=True)
    var = jnp.mean(jnp.square(z - mean), axis=0, keepdims=True)
    return (z - mean) * lax.rsqrt(var + EPS)


def _conv3x3_im2col(x_ref, w_ref, xp_ref, d, pad):
    """3x3 conv (stride 1, padding=dilation) as a single fat-K matmul.

    x_ref : (1, H, W, Cin) input tile ref (bf16 or f32)
    w_ref : (9*Cin, Cout) bf16 weights, (ky, kx, cin)-major rows
    xp_ref: (H+2*pad, W+2*pad, Cin) f32 VMEM scratch holding the zero halo
    returns (H*W, Cout) f32
    """
    _, H, W, Cin = x_ref.shape
    # Zero halo built in VMEM (no padded copy of the input in HBM).
    xp_ref[...] = jnp.zeros(xp_ref.shape, xp_ref.dtype)
    xp_ref[pad:pad + H, pad:pad + W, :] = x_ref[0].astype(jnp.float32)

    # im2col: 9 shifted taps concatenated along channels -> one K=9*Cin matmul.
    taps = []
    for ky in range(3):
        for kx in range(3):
            y0 = pad - d + ky * d
            x0 = pad - d + kx * d
            taps.append(xp_ref[y0:y0 + H, x0:x0 + W, :])
    patches = jnp.concatenate(taps, axis=-1).reshape(H * W, 9 * Cin)

    return jnp.dot(patches.astype(jnp.bfloat16), w_ref[...],
                   preferred_element_type=jnp.float32)


# ---------------------------------------------------------------------------
# Kernel A: 3x3 conv (no bias) + InstanceNorm + ReLU
# ---------------------------------------------------------------------------
def _conv_in_relu_kernel(x_ref, w_ref, o_ref, xp_ref, acc_ref, *, dilation, pad):
    acc_ref[...] = _conv3x3_im2col(x_ref, w_ref, xp_ref, dilation, pad)
    y = jnp.maximum(_instance_norm(acc_ref[...]), 0.0)
    o_ref[...] = y[None].astype(o_ref.dtype)


def conv3x3_in_relu(x_nhwc, w_hwio, dilation=1):
    """relu(InstanceNorm(conv3x3(x))). Returns bf16 NHWC activation."""
    N, H, W, Cin = x_nhwc.shape
    Cout = w_hwio.shape[-1]
    d = dilation
    pad = ((d + 7) // 8) * 8          # aligned interior offset for the halo scratch
    w = w_hwio.reshape(9 * Cin, Cout).astype(jnp.bfloat16)
    x = x_nhwc.astype(jnp.bfloat16)   # bf16 in HBM: half the input traffic
    kernel = functools.partial(_conv_in_relu_kernel, dilation=d, pad=pad)
    y = pl.pallas_call(
        kernel,
        out_shape=jax.ShapeDtypeStruct((N, H * W, Cout), jnp.bfloat16),
        grid=(N,),
        in_specs=[
            pl.BlockSpec((1, H, W, Cin), lambda n: (n, 0, 0, 0)),
            pl.BlockSpec((9 * Cin, Cout), lambda n: (0, 0)),
        ],
        out_specs=pl.BlockSpec((1, H * W, Cout), lambda n: (n, 0, 0)),
        scratch_shapes=[
            pltpu.VMEM((H + 2 * pad, W + 2 * pad, Cin), jnp.float32),
            pltpu.VMEM((H * W, Cout), jnp.float32),
        ],
        compiler_params=_compiler_params(),
    )(x, w)
    return y.reshape(N, H, W, Cout)   # metadata-only reshape on the HBM array


# ---------------------------------------------------------------------------
# Kernel B (identity skip): conv2 + IN + ReLU, then relu(x + y2)
# ---------------------------------------------------------------------------
def _conv_in_relu_res_kernel(y_ref, w_ref, xs_ref, o_ref, xp_ref, acc_ref,
                             *, dilation, pad):
    acc_ref[...] = _conv3x3_im2col(y_ref, w_ref, xp_ref, dilation, pad)
    y2 = jnp.maximum(_instance_norm(acc_ref[...]), 0.0)
    out = jnp.maximum(xs_ref[0] + y2, 0.0)
    o_ref[...] = out[None].astype(o_ref.dtype)


def conv3x3_in_relu_residual(y1_nhwc, w_hwio, x_nhwc, dilation=1):
    N, H, W, C = y1_nhwc.shape
    d = dilation
    pad = ((d + 7) // 8) * 8
    w = w_hwio.reshape(9 * C, C).astype(jnp.bfloat16)
    xs = x_nhwc.reshape(N, H * W, C).astype(jnp.float32)  # skip stays f32
    kernel = functools.partial(_conv_in_relu_res_kernel, dilation=d, pad=pad)
    out = pl.pallas_call(
        kernel,
        out_shape=jax.ShapeDtypeStruct((N, H * W, C), jnp.float32),
        grid=(N,),
        in_specs=[
            pl.BlockSpec((1, H, W, C), lambda n: (n, 0, 0, 0)),
            pl.BlockSpec((9 * C, C), lambda n: (0, 0)),
            pl.BlockSpec((1, H * W, C), lambda n: (n, 0, 0)),
        ],
        out_specs=pl.BlockSpec((1, H * W, C), lambda n: (n, 0, 0)),
        scratch_shapes=[
            pltpu.VMEM((H + 2 * pad, W + 2 * pad, C), jnp.float32),
            pltpu.VMEM((H * W, C), jnp.float32),
        ],
        compiler_params=_compiler_params(),
    )(y1_nhwc, w, xs)
    return out.reshape(N, H, W, C)


# ---------------------------------------------------------------------------
# Kernel B (downsample skip): conv2 + IN + ReLU, skip = IN(1x1conv(x)),
# then relu(skip + y2).  The 1x1-conv bias is omitted: it is exactly
# cancelled by the InstanceNorm mean subtraction (same as in PyTorch).
# ---------------------------------------------------------------------------
def _conv_in_relu_down_res_kernel(y_ref, w_ref, xs_ref, wd_ref, o_ref,
                                  xp_ref, acc_ref, *, dilation, pad):
    acc_ref[...] = _conv3x3_im2col(y_ref, w_ref, xp_ref, dilation, pad)
    y2 = jnp.maximum(_instance_norm(acc_ref[...]), 0.0)
    skip = jnp.dot(xs_ref[0], wd_ref[...], preferred_element_type=jnp.float32)
    skip = _instance_norm(skip)
    out = jnp.maximum(skip + y2, 0.0)
    o_ref[...] = out[None].astype(o_ref.dtype)


def conv3x3_in_relu_downsample_residual(y1_nhwc, w_hwio, x_nhwc, w_down,
                                        dilation=1):
    N, H, W, C = y1_nhwc.shape
    Cin = x_nhwc.shape[-1]
    Cout = w_down.shape[-1]
    d = dilation
    pad = ((d + 7) // 8) * 8
    w = w_hwio.reshape(9 * C, Cout).astype(jnp.bfloat16)
    xs = x_nhwc.reshape(N, H * W, Cin).astype(jnp.bfloat16)
    wd = w_down.astype(jnp.bfloat16)
    kernel = functools.partial(_conv_in_relu_down_res_kernel, dilation=d, pad=pad)
    out = pl.pallas_call(
        kernel,
        out_shape=jax.ShapeDtypeStruct((N, H * W, Cout), jnp.float32),
        grid=(N,),
        in_specs=[
            pl.BlockSpec((1, H, W, C), lambda n: (n, 0, 0, 0)),
            pl.BlockSpec((9 * C, Cout), lambda n: (0, 0)),
            pl.BlockSpec((1, H * W, Cin), lambda n: (n, 0, 0)),
            pl.BlockSpec((Cin, Cout), lambda n: (0, 0)),
        ],
        out_specs=pl.BlockSpec((1, H * W, Cout), lambda n: (n, 0, 0)),
        scratch_shapes=[
            pltpu.VMEM((H + 2 * pad, W + 2 * pad, C), jnp.float32),
            pltpu.VMEM((H * W, Cout), jnp.float32),
        ],
        compiler_params=_compiler_params(),
    )(y1_nhwc, w, xs, wd)
    return out.reshape(N, H, W, Cout)


# ---------------------------------------------------------------------------
# ResidualBlock forward (stride=1)
# ---------------------------------------------------------------------------
def residual_block_forward(x_nchw, params, dilation=1):
    # NCHW in/out (PyTorch convention); NHWC inside the kernels.
    x = jnp.transpose(x_nchw, (0, 2, 3, 1)).astype(jnp.float32)

    y1 = conv3x3_in_relu(x, params["w1"], dilation)            # relu(norm1(conv1(x)))

    if "w_down" in params:
        out = conv3x3_in_relu_downsample_residual(              # conv2 + IN + ReLU +
            y1, params["w2"], x, params["w_down"], dilation)    # 1x1/IN skip + add + ReLU
    else:
        out = conv3x3_in_relu_residual(y1, params["w2"], x, dilation)

    return jnp.transpose(out, (0, 3, 1, 2))


def init_params(key, in_planes, planes):
    k1, k2, k3 = jax.random.split(key, 3)
    params = {
        # HWIO layouts (PyTorch OIHW conv weights transposed to (3,3,Cin,Cout))
        "w1": 0.1 * jax.random.normal(k1, (3, 3, in_planes, planes), jnp.float32),
        "w2": 0.1 * jax.random.normal(k2, (3, 3, planes, planes), jnp.float32),
    }
    if in_planes != planes:  # stride==1 here, so downsample iff channels differ
        # 1x1 conv weight only; its bias is a no-op through InstanceNorm.
        params["w_down"] = 0.1 * jax.random.normal(k3, (in_planes, planes),
                                                   jnp.float32)
    return params


if __name__ == "__main__":
    key = jax.random.PRNGKey(0)
    kx, kp = jax.random.split(key)

    N, in_planes, planes, H, W = 2, 4, 8, 16, 16

    # Downsample configuration (in_planes != planes -> 1x1-conv + IN skip).
    x = jax.random.normal(kx, (N, in_planes, H, W), jnp.float32)  # NCHW
    params = init_params(kp, in_planes, planes)
    out = jax.block_until_ready(residual_block_forward(x, params, dilation=1))
    assert out.shape == (N, planes, H, W)
    assert bool(jnp.isfinite(out).all())

    # Identity-skip configuration (in_planes == planes).
    x2 = jax.random.normal(kx, (N, planes, H, W), jnp.float32)
    params_id = init_params(kp, planes, planes)
    out2 = jax.block_until_ready(residual_block_forward(x2, params_id, dilation=1))
    assert out2.shape == (N, planes, H, W)
    assert bool(jnp.isfinite(out2).all())

    print("KERNEL_OK")
</pallas_src>

<mosaic_0001>
module attributes {stable_mosaic.version = 11 : i64} {
  func.func @_conv_in_relu_kernel(%arg0: i32, %arg1: memref<1x16x16x4xbf16, #tpu.memory_space<vmem>>, %arg2: memref<36x8xbf16, #tpu.memory_space<vmem>>, %arg3: memref<1x256x8xbf16, #tpu.memory_space<vmem>>, %arg4: memref<32x32x4xf32, #tpu.memory_space<vmem>>, %arg5: memref<256x8xf32, #tpu.memory_space<vmem>>) attributes {dimension_semantics = [#tpu.dimension_semantics<parallel>], iteration_bounds = array<i64: 2>, scalar_prefetch = 0 : i64, scratch_operands = 2 : i64, tpu.core_type = #tpu.core_type<tc>, window_params = [{transform_indices = @transform_0, window_bounds = array<i64: 1, 16, 16, 4>}, {pipeline_mode = #tpu.pipeline_mode<synchronous>, transform_indices = @transform_1, window_bounds = array<i64: 36, 8>}, {transform_indices = @transform_2, window_bounds = array<i64: 1, 256, 8>}]} {
    %cst = arith.constant 0.000000e+00 : f32
    %0 = vector.broadcast %cst : f32 to vector<32x32x4xf32>
    %c0 = arith.constant 0 : index
    %c0_0 = arith.constant 0 : index
    %c0_1 = arith.constant 0 : index
    %1 = vector.load %arg4[%c0, %c0_0, %c0_1] : memref<32x32x4xf32, #tpu.memory_space<vmem>>, vector<32x32x4xf32>
    tpu.vector_store %arg4[%c0, %c0_0, %c0_1], %0 {strides = array<i32>} : memref<32x32x4xf32, #tpu.memory_space<vmem>>, vector<32x32x4xf32>,
    %c0_2 = arith.constant 0 : index
    %c0_3 = arith.constant 0 : index
    %c0_4 = arith.constant 0 : index
    %c0_5 = arith.constant 0 : index
    %2 = vector.load %arg1[%c0_2, %c0_3, %c0_4, %c0_5] : memref<1x16x16x4xbf16, #tpu.memory_space<vmem>>, vector<1x16x16x4xbf16>
    %3 = vector.shape_cast %2 : vector<1x16x16x4xbf16> to vector<16x16x4xbf16>
    %4 = arith.extf %3 : vector<16x16x4xbf16> to vector<16x16x4xf32>
    %c8 = arith.constant 8 : index
    %c8_6 = arith.constant 8 : index
    %c0_7 = arith.constant 0 : index
    %5 = vector.load %arg4[%c8, %c8_6, %c0_7] : memref<32x32x4xf32, #tpu.memory_space<vmem>>, vector<16x16x4xf32>
    tpu.vector_store %arg4[%c8, %c8_6, %c0_7], %4 {strides = array<i32>} : memref<32x32x4xf32, #tpu.memory_space<vmem>>, vector<16x16x4xf32>,
    %c7 = arith.constant 7 : index
    %c7_8 = arith.constant 7 : index
    %c0_9 = arith.constant 0 : index
    %6 = vector.load %arg4[%c7, %c7_8, %c0_9] : memref<32x32x4xf32, #tpu.memory_space<vmem>>, vector<16x16x4xf32>
    %c7_10 = arith.constant 7 : index
    %c8_11 = arith.constant 8 : index
    %c0_12 = arith.constant 0 : index
    %7 = vector.load %arg4[%c7_10, %c8_11, %c0_12] : memref<32x32x4xf32, #tpu.memory_space<vmem>>, vector<16x16x4xf32>
    %c7_13 = arith.constant 7 : index
    %c9 = arith.constant 9 : index
    %c0_14 = arith.constant 0 : index
    %8 = vector.load %arg4[%c7_13, %c9, %c0_14] : memref<32x32x4xf32, #tpu.memory_space<vmem>>, vector<16x16x4xf32>
    %c8_15 = arith.constant 8 : index
    %c7_16 = arith.constant 7 : index
    %c0_17 = arith.constant 0 : index
    %9 = vector.load %arg4[%c8_15, %c7_16, %c0_17] : memref<32x32x4xf32, #tpu.memory_space<vmem>>, vector<16x16x4xf32>
    %c8_18 = arith.constant 8 : index
    %c8_19 = arith.constant 8 : index
    %c0_20 = arith.constant 0 : index
    %10 = vector.load %arg4[%c8_18, %c8_19, %c0_20] : memref<32x32x4xf32, #tpu.memory_space<vmem>>, vector<16x16x4xf32>
    %c8_21 = arith.constant 8 : index
    %c9_22 = arith.constant 9 : index
    %c0_23 = arith.constant 0 : index
    %11 = vector.load %arg4[%c8_21, %c9_22, %c0_23] : memref<32x32x4xf32, #tpu.memory_space<vmem>>, vector<16x16x4xf32>
    %c9_24 = arith.constant 9 : index
    %c7_25 = arith.constant 7 : index
    %c0_26 = arith.constant 0 : index
    %12 = vector.load %arg4[%c9_24, %c7_25, %c0_26] : memref<32x32x4xf32, #tpu.memory_space<vmem>>, vector<16x16x4xf32>
    %c9_27 = arith.constant 9 : index
    %c8_28 = arith.constant 8 : index
    %c0_29 = arith.constant 0 : index
    %13 = vector.load %arg4[%c9_27, %c8_28, %c0_29] : memref<32x32x4xf32, #tpu.memory_space<vmem>>, vector<16x16x4xf32>
    %c9_30 = arith.constant 9 : index
    %c9_31 = arith.constant 9 : index
    %c0_32 = arith.constant 0 : index
    %14 = vector.load %arg4[%c9_30, %c9_31, %c0_32] : memref<32x32x4xf32, #tpu.memory_space<vmem>>, vector<16x16x4xf32>
    %15 = tpu.concatenate %6, %7, %8, %9, %10, %11, %12, %13, %14 in 2 : vector<16x16x4xf32>, vector<16x16x4xf32>, vector<16x16x4xf32>, vector<16x16x4xf32>, vector<16x16x4xf32>, vector<16x16x4xf32>, vector<16x16x4xf32>, vector<16x16x4xf32>, vector<16x16x4xf32> -> vector<16x16x36xf32>
    %16 = vector.shape_cast %15 : vector<16x16x36xf32> to vector<256x36xf32>
    %17 = arith.truncf %16 : vector<256x36xf32> to vector<256x36xbf16>
    %c0_33 = arith.constant 0 : index
    %c0_34 = arith.constant 0 : index
    %18 = vector.load %arg2[%c0_33, %c0_34] : memref<36x8xbf16, #tpu.memory_space<vmem>>, vector<36x8xbf16>
    %cst_35 = arith.constant dense<0.000000e+00> : vector<256x8xf32>
    %19 = tpu.matmul %17, %18, %cst_35 {dimension_numbers = #tpu.dot_dimension_numbers<[1], [0], [0], [1], [0, 0, 1, 1], [], []>} : vector<256x36xbf16>, vector<36x8xbf16>, vector<256x8xf32> -> vector<256x8xf32>
    %c0_36 = arith.constant 0 : index
    %c0_37 = arith.constant 0 : index
    %20 = vector.load %arg5[%c0_36, %c0_37] : memref<256x8xf32, #tpu.memory_space<vmem>>, vector<256x8xf32>
    tpu.vector_store %arg5[%c0_36, %c0_37], %19 {strides = array<i32>} : memref<256x8xf32, #tpu.memory_space<vmem>>, vector<256x8xf32>,
    %c0_38 = arith.constant 0 : index
    %c0_39 = arith.constant 0 : index
    %21 = vector.load %arg5[%c0_38, %c0_39] : memref<256x8xf32, #tpu.memory_space<vmem>>, vector<256x8xf32>
    %cst_40 = arith.constant dense<0.000000e+00> : vector<8xf32>
    %22 = vector.multi_reduction <add>, %21, %cst_40 [0] : vector<256x8xf32> to vector<8xf32>
    %23 = vector.shape_cast %22 : vector<8xf32> to vector<1x8xf32>
    %cst_41 = arith.constant 2.560000e+02 : f32
    %24 = vector.broadcast %cst_41 : f32 to vector<1x8xf32>
    %25 = arith.divf %23, %24 : vector<1x8xf32>
    %26 = vector.broadcast %25 : vector<1x8xf32> to vector<256x8xf32>
    %27 = arith.subf %21, %26 : vector<256x8xf32>
    %28 = arith.mulf %27, %27 : vector<256x8xf32>
    %cst_42 = arith.constant dense<0.000000e+00> : vector<8xf32>
    %29 = vector.multi_reduction <add>, %28, %cst_42 [0] : vector<256x8xf32> to vector<8xf32>
    %30 = vector.shape_cast %29 : vector<8xf32> to vector<1x8xf32>
    %cst_43 = arith.constant 2.560000e+02 : f32
    %31 = vector.broadcast %cst_43 : f32 to vector<1x8xf32>
    %32 = arith.divf %30, %31 : vector<1x8xf32>
    %33 = vector.broadcast %25 : vector<1x8xf32> to vector<256x8xf32>
    %34 = arith.subf %21, %33 : vector<256x8xf32>
    %cst_44 = arith.constant 9.99999974E-6 : f32
    %35 = vector.broadcast %cst_44 : f32 to vector<1x8xf32>
    %36 = arith.addf %32, %35 : vector<1x8xf32>
    %37 = math.rsqrt %36 : vector<1x8xf32>
    %38 = vector.broadcast %37 : vector<1x8xf32> to vector<256x8xf32>
    %39 = arith.mulf %34, %38 : vector<256x8xf32>
    %cst_45 = arith.constant 0.000000e+00 : f32
    %40 = vector.broadcast %cst_45 : f32 to vector<256x8xf32>
    %41 = arith.maximumf %39, %40 : vector<256x8xf32>
    %42 = vector.shape_cast %41 : vector<256x8xf32> to vector<1x256x8xf32>
    %43 = arith.truncf %42 : vector<1x256x8xf32> to vector<1x256x8xbf16>
    %c0_46 = arith.constant 0 : index
    %c0_47 = arith.constant 0 : index
    %c0_48 = arith.constant 0 : index
    %44 = vector.load %arg3[%c0_46, %c0_47, %c0_48] : memref<1x256x8xbf16, #tpu.memory_space<vmem>>, vector<1x256x8xbf16>
    tpu.vector_store %arg3[%c0_46, %c0_47, %c0_48], %43 {strides = array<i32>} : memref<1x256x8xbf16, #tpu.memory_space<vmem>>, vector<1x256x8xbf16>,
    return
  }
  func.func @transform_0(%arg0: i32) -> (i32, i32, i32, i32) {
    %c0_i32 = arith.constant 0 : i32
    %c0_i32_0 = arith.constant 0 : i32
    %c0_i32_1 = arith.constant 0 : i32
    %c0_i32_2 = arith.constant 0 : i32
    return %arg0, %c0_i32, %c0_i32_0, %c0_i32_1 : i32, i32, i32, i32
  }
  func.func @transform_1(%arg0: i32) -> (i32, i32) {
    %c0_i32 = arith.constant 0 : i32
    %c0_i32_0 = arith.constant 0 : i32
    %c0_i32_1 = arith.constant 0 : i32
    return %c0_i32, %c0_i32_0 : i32, i32
  }
  func.func @transform_2(%arg0: i32) -> (i32, i32, i32) {
    %c0_i32 = arith.constant 0 : i32
    %c0_i32_0 = arith.constant 0 : i32
    %c0_i32_1 = arith.constant 0 : i32
    return %arg0, %c0_i32, %c0_i32_0 : i32, i32, i32
  }
}

</mosaic_0001>

<llo_original>
// kernel: tpu_custom_call.1
$region0: #{tpu_custom_call.1}
  #allocation0 [shape = 'u32[]', space=smem, size = 0x4, offset = 0x4, fixed_abs, tag = 'smem constant byte address 0x4 - core index']
  #allocation1 [shape = 'u32[72,128]{1,0:T(1,128)}', space=vmem, size = 0x9000, scoped, tag = 'internal scratch']
  #allocation2 [shape = 'f32[32,32,4]{2,1,0:T(8,128)}', space=vmem, size = 0x80000, scoped, tag = 'scratch operand']
  #allocation3 [shape = 'f32[256,8]{1,0:T(8,128)}', space=vmem, size = 0x20000, scoped, tag = 'scratch operand']
  %s0 = inlined_call_operand.vmem [shape: bf16[2,16,16,4], index: 0, kind: input, shape index: {}]
  %s1 = inlined_call_operand.vmem [shape: bf16[36,8], index: 1, kind: input, shape index: {}]
  %s2 = inlined_call_operand.vmem [shape: bf16[2,256,8], index: 2, kind: output, shape index: {}]
  %s3 = sld [smem:[#allocation0]]
  $region41: #{tpu_custom_call.1} parent=0
    _
  %s5 = ssub.s32 1, %s3
  %s6 = scalar_select 0, %s5, %s3
  loop: start=0, step=1, limit=4
  $region2: #{tpu_custom_call.1} parent=0 // loop_pre_header
    _
  $region3: #{tpu_custom_call.1} parent=0 // loop_header
    %s8 = sphi 0, %s12
    %p9 = scmp.ge.s32.totalorder %s8, 4
    %s18 = sphi 0, %s20
    %s21 = sphi 0, %s18
    %s22 = sphi 0, %s21
    %s38 = sphi 0, %s22
    %s42 = sphi 0, %s42
    %s44 = sphi 0, %s42
    %s45 = sphi 0, %s44
    %s59 = sphi 0, %s45
    %s65 = sphi 0, %s67
    %s68 = sphi 0, %s65
    %s69 = sphi 0, %s68
    %s85 = sphi 0, %s69
  $region4: #{tpu_custom_call.1} parent=0 // loop_header_branch
    %11 = sbr.rel (%p9) target = $region8
  $region5: #{tpu_custom_call.1} parent=0 // loop_body
    %s13 = ssub.s32 %s8, 1
    %s14 = ssub.s32 %s8, 2
    %s15 = sadd.s32 %s8, 1
    %s16 = ssub.s32 %s8, %s15
    %p17 = scmp.eq.s32.totalorder %s16, 0
    %s19 = sadd.s32 %s18, 1
    %s20 = scalar_select %p17, %s18, %s19
    %p23 = pneg %p17
    %p24 = scmp.eq.s32.totalorder %s8, 1
    %p25 = por %p23, %p24
    %p26 = scmp.ne.s32.totalorder %s18, %s21
    %p27 = scmp.eq.s32.totalorder %s8, 0
    %p28 = por %p26, %p27
    %p29 = scmp.ne.s32.totalorder %s18, %s21
    %p30 = scmp.eq.s32.totalorder %s13, 1
    %p31 = por %p29, %p30
    %p32 = scmp.ne.s32.totalorder %s21, %s22
    %p33 = scmp.eq.s32.totalorder %s13, 0
    %p34 = por %p32, %p33
    %p35 = scmp.ne.s32.totalorder %s21, %s22
    %p36 = scmp.eq.s32.totalorder %s14, 1
    %p37 = por %p35, %p36
    %p39 = scmp.ne.s32.totalorder %s22, %s38
    %p40 = scmp.eq.s32.totalorder %s14, 0
    %p41 = por %p39, %p40
    %s43 = sadd.s32 %s42, 1
    %p46 = scmp.eq.s32.totalorder %s8, 1
    %p47 = scmp.ne.s32.totalorder %s42, %s44
    %p48 = scmp.eq.s32.totalorder %s8, 0
    %p49 = por %p47, %p48
    %p50 = scmp.ne.s32.totalorder %s42, %s44
    %p51 = scmp.eq.s32.totalorder %s13, 1
    %p52 = por %p50, %p51
    %p53 = scmp.ne.s32.totalorder %s44, %s45
    %p54 = scmp.eq.s32.totalorder %s13, 0
    %p55 = por %p53, %p54
    %p56 = scmp.ne.s32.totalorder %s44, %s45
    %p57 = scmp.eq.s32.totalorder %s14, 1
    %p58 = por %p56, %p57
    %p60 = scmp.ne.s32.totalorder %s45, %s59
    %p61 = scmp.eq.s32.totalorder %s14, 0
    %p62 = por %p60, %p61
    %s63 = ssub.s32 %s8, %s15
    %p64 = scmp.eq.s32.totalorder %s63, 0
    %s66 = sadd.s32 %s65, 1
    %s67 = scalar_select %p64, %s65, %s66
    %p70 = pneg %p64
    %p71 = scmp.eq.s32.totalorder %s8, 1
    %p72 = por %p70, %p71
    %p73 = scmp.ne.s32.totalorder %s65, %s68
    %p74 = scmp.eq.s32.totalorder %s8, 0
    %p75 = por %p73, %p74
    %p76 = scmp.ne.s32.totalorder %s65, %s68
    %p77 = scmp.eq.s32.totalorder %s13, 1
    %p78 = por %p76, %p77
    %p79 = scmp.ne.s32.totalorder %s68, %s69
    %p80 = scmp.eq.s32.totalorder %s13, 0
    %p81 = por %p79, %p80
    %p82 = scmp.ne.s32.totalorder %s68, %s69
    %p83 = scmp.eq.s32.totalorder %s14, 1
    %p84 = por %p82, %p83
    %p86 = scmp.ne.s32.totalorder %s69, %s85
    %p87 = scmp.eq.s32.totalorder %s14, 0
    %p88 = por %p86, %p87
    %p89 = scmp.le.s32.totalorder 1, %s8
    %p90 = scmp.lt.s32.totalorder %s8, 3
    %p91 = pnand %p89, %p90
    %p92 = pneg %p91
    // Predicated region
    $region9: #{tpu_custom_call.1} parent=5 // pred_check
      _
    $region10: #{tpu_custom_call.1} parent=5 // pred_check_branch
      %94 = sbr.rel (%p91) target = $region12
    $region11: #{tpu_custom_call.1} parent=5 // pred_region
      %s95 = ssub.s32 %s8, 1
      // Predicated region
      $region13: #{tpu_custom_call.1} parent=11 // pred_check
        %p96 = pneg %p55
      $region14: #{tpu_custom_call.1} parent=11 // pred_check_branch
        %98 = sbr.rel (%p96) target = $region16
      $region15: #{tpu_custom_call.1} parent=11 // pred_region
        _
      $region16: #{tpu_custom_call.1} parent=11 // pred_fallthru
        _
    $region12: #{tpu_custom_call.1} parent=5 // pred_fallthru
      _
    %p99 = scmp.lt.s32.totalorder %s8, 2
    // Predicated region
    $region17: #{tpu_custom_call.1} parent=5 // pred_check
      %p100 = pneg %p99
    $region18: #{tpu_custom_call.1} parent=5 // pred_check_branch
      %102 = sbr.rel (%p100) target = $region20
    $region19: #{tpu_custom_call.1} parent=5 // pred_region
      // Predicated region
      $region21: #{tpu_custom_call.1} parent=19 // pred_check
        %p103 = pneg %p28
      $region22: #{tpu_custom_call.1} parent=19 // pred_check_branch
        %105 = sbr.rel (%p103) target = $region24
      $region23: #{tpu_custom_call.1} parent=19 // pred_region
        %p106 = scmp.lt.s32.totalorder %s8, 1
        %s107 = scalar_select %p106, %s8, 1
        %s108 = smul.addr %s107, 32
        %s109 = smul.addr %s108, 4
        %s110 = scalar_lea.vmem %s0, %s109
      $region24: #{tpu_custom_call.1} parent=19 // pred_fallthru
        _
    $region20: #{tpu_custom_call.1} parent=5 // pred_fallthru
      _
    %p111 = scmp.le.s32.totalorder 1, %s8
    %p112 = scmp.lt.s32.totalorder %s8, 3
    %p113 = pnand %p111, %p112
    %p114 = pneg %p113
    // Predicated region
    $region25: #{tpu_custom_call.1} parent=5 // pred_check
      _
    $region26: #{tpu_custom_call.1} parent=5 // pred_check_branch
      %116 = sbr.rel (%p113) target = $region28
    $region27: #{tpu_custom_call.1} parent=5 // pred_region
      %s117 = ssub.s32 %s8, 1
      %p118 = scmp.lt.s32.totalorder %s13, 1
      %s119 = scalar_select %p118, %s13, 1
      %s120 = smul.addr %s119, 32
      %s121 = smul.addr %s120, 4
      %s122 = scalar_lea.vmem %s0, %s121
      %p123 = pneg %p34
      %p124 = pneg %p31
      %p125 = pneg %p55
      %p126 = pneg %p52
      %p127 = pneg %p81
      %p128 = pneg %p78
      %p129 = scmp.lt.s32.totalorder %s13, 1
      %s130 = scalar_select %p129, %s13, 1
      %s131 = smul.addr %s130, 32
      %s132 = smul.addr %s131, 4
      %s133 = scalar_lea.vmem %s2, %s132
      %p134 = scmp.lt.s32.totalorder %s13, 1
      %s135 = scalar_select %p134, %s13, 1
      %s136 = smul.addr %s135, 32
      %s137 = smul.addr %s136, 4
      %s138 = scalar_lea.vmem %s0, %s137
      %p139 = scmp.lt.s32.totalorder %s13, 1
      %s140 = scalar_select %p139, %s13, 1
      %s141 = smul.addr %s140, 32
      %s142 = smul.addr %s141, 4
      %s143 = scalar_lea.vmem %s2, %s142
      %vm145 = vcmask 31744
      %146 = vst.msk [vmem:[#allocation2] sm:$0xff] %vm145, 0.0
      %147 = vst.msk [vmem:[#allocation2 + $0x8] sm:$0xff] %vm145, 0.0
      %148 = vst.msk [vmem:[#allocation2 + $0x10] sm:$0xff] %vm145, 0.0
      %149 = vst.msk [vmem:[#allocation2 + $0x18] sm:$0xff] %vm145, 0.0
      %150 = vst.msk [vmem:[#allocation2 + $0x20] sm:$0xff] %vm145, 0.0
      %151 = vst.msk [vmem:[#allocation2 + $0x28] sm:$0xff] %vm145, 0.0
      %152 = vst.msk [vmem:[#allocation2 + $0x30] sm:$0xff] %vm145, 0.0
      %153 = vst.msk [vmem:[#allocation2 + $0x38] sm:$0xff] %vm145, 0.0
      %154 = vst.msk [vmem:[#allocation2 + $0x40] sm:$0xff] %vm145, 0.0
      %155 = vst.msk [vmem:[#allocation2 + $0x48] sm:$0xff] %vm145, 0.0
      %156 = vst.msk [vmem:[#allocation2 + $0x50] sm:$0xff] %vm145, 0.0
      %157 = vst.msk [vmem:[#allocation2 + $0x58] sm:$0xff] %vm145, 0.0
      %158 = vst.msk [vmem:[#allocation2 + $0x60] sm:$0xff] %vm145, 0.0
      %159 = vst.msk [vmem:[#allocation2 + $0x68] sm:$0xff] %vm145, 0.0
      %160 = vst.msk [vmem:[#allocation2 + $0x70] sm:$0xff] %vm145, 0.0
      %161 = vst.msk [vmem:[#allocation2 + $0x78] sm:$0xff] %vm145, 0.0
      %162 = vst.msk [vmem:[#allocation2 + $0x80] sm:$0xff] %vm145, 0.0
      %163 = vst.msk [vmem:[#allocation2 + $0x88] sm:$0xff] %vm145, 0.0
      %164 = vst.msk [vmem:[#allocation2 + $0x90] sm:$0xff] %vm145, 0.0
      %165 = vst.msk [vmem:[#allocation2 + $0x98] sm:$0xff] %vm145, 0.0
      %166 = vst.msk [vmem:[#allocation2 + $0xa0] sm:$0xff] %vm145, 0.0
      %167 = vst.msk [vmem:[#allocation2 + $0xa8] sm:$0xff] %vm145, 0.0
      %168 = vst.msk [vmem:[#allocation2 + $0xb0] sm:$0xff] %vm145, 0.0
      %169 = vst.msk [vmem:[#allocation2 + $0xb8] sm:$0xff] %vm145, 0.0
      %170 = vst.msk [vmem:[#allocation2 + $0xc0] sm:$0xff] %vm145, 0.0
      %171 = vst.msk [vmem:[#allocation2 + $0xc8] sm:$0xff] %vm145, 0.0
      %172 = vst.msk [vmem:[#allocation2 + $0xd0] sm:$0xff] %vm145, 0.0
      %173 = vst.msk [vmem:[#allocation2 + $0xd8] sm:$0xff] %vm145, 0.0
      %174 = vst.msk [vmem:[#allocation2 + $0xe0] sm:$0xff] %vm145, 0.0
      %175 = vst.msk [vmem:[#allocation2 + $0xe8] sm:$0xff] %vm145, 0.0
      %176 = vst.msk [vmem:[#allocation2 + $0xf0] sm:$0xff] %vm145, 0.0
      %177 = vst.msk [vmem:[#allocation2 + $0xf8] sm:$0xff] %vm145, 0.0
      %178 = vst.msk [vmem:[#allocation2 + $0x100] sm:$0xff] %vm145, 0.0
      %179 = vst.msk [vmem:[#allocation2 + $0x108] sm:$0xff] %vm145, 0.0
      %180 = vst.msk [vmem:[#allocation2 + $0x110] sm:$0xff] %vm145, 0.0
      %181 = vst.msk [vmem:[#allocation2 + $0x118] sm:$0xff] %vm145, 0.0
      %182 = vst.msk [vmem:[#allocation2 + $0x120] sm:$0xff] %vm145, 0.0
      %183 = vst.msk [vmem:[#allocation2 + $0x128] sm:$0xff] %vm145, 0.0
      %184 = vst.msk [vmem:[#allocation2 + $0x130] sm:$0xff] %vm145, 0.0
      %185 = vst.msk [vmem:[#allocation2 + $0x138] sm:$0xff] %vm145, 0.0
      %186 = vst.msk [vmem:[#allocation2 + $0x140] sm:$0xff] %vm145, 0.0
      %187 = vst.msk [vmem:[#allocation2 + $0x148] sm:$0xff] %vm145, 0.0
      %188 = vst.msk [vmem:[#allocation2 + $0x150] sm:$0xff] %vm145, 0.0
      %189 = vst.msk [vmem:[#allocation2 + $0x158] sm:$0xff] %vm145, 0.0
      %190 = vst.msk [vmem:[#allocation2 + $0x160] sm:$0xff] %vm145, 0.0
      %191 = vst.msk [vmem:[#allocation2 + $0x168] sm:$0xff] %vm145, 0.0
      %192 = vst.msk [vmem:[#allocation2 + $0x170] sm:$0xff] %vm145, 0.0
      %193 = vst.msk [vmem:[#allocation2 + $0x178] sm:$0xff] %vm145, 0.0
      %194 = vst.msk [vmem:[#allocation2 + $0x180] sm:$0xff] %vm145, 0.0
      %195 = vst.msk [vmem:[#allocation2 + $0x188] sm:$0xff] %vm145, 0.0
      %196 = vst.msk [vmem:[#allocation2 + $0x190] sm:$0xff] %vm145, 0.0
      %197 = vst.msk [vmem:[#allocation2 + $0x198] sm:$0xff] %vm145, 0.0
      %198 = vst.msk [vmem:[#allocation2 + $0x1a0] sm:$0xff] %vm145, 0.0
      %199 = vst.msk [vmem:[#allocation2 + $0x1a8] sm:$0xff] %vm145, 0.0
      %200 = vst.msk [vmem:[#allocation2 + $0x1b0] sm:$0xff] %vm145, 0.0
      %201 = vst.msk [vmem:[#allocation2 + $0x1b8] sm:$0xff] %vm145, 0.0
      %202 = vst.msk [vmem:[#allocation2 + $0x1c0] sm:$0xff] %vm145, 0.0
      %203 = vst.msk [vmem:[#allocation2 + $0x1c8] sm:$0xff] %vm145, 0.0
      %204 = vst.msk [vmem:[#allocation2 + $0x1d0] sm:$0xff] %vm145, 0.0
      %205 = vst.msk [vmem:[#allocation2 + $0x1d8] sm:$0xff] %vm145, 0.0
      %206 = vst.msk [vmem:[#allocation2 + $0x1e0] sm:$0xff] %vm145, 0.0
      %207 = vst.msk [vmem:[#allocation2 + $0x1e8] sm:$0xff] %vm145, 0.0
      %208 = vst.msk [vmem:[#allocation2 + $0x1f0] sm:$0xff] %vm145, 0.0
      %209 = vst.msk [vmem:[#allocation2 + $0x1f8] sm:$0xff] %vm145, 0.0
      %210 = vst.msk [vmem:[#allocation2 + $0x200] sm:$0xff] %vm145, 0.0
      %211 = vst.msk [vmem:[#allocation2 + $0x208] sm:$0xff] %vm145, 0.0
      %212 = vst.msk [vmem:[#allocation2 + $0x210] sm:$0xff] %vm145, 0.0
      %213 = vst.msk [vmem:[#allocation2 + $0x218] sm:$0xff] %vm145, 0.0
      %214 = vst.msk [vmem:[#allocation2 + $0x220] sm:$0xff] %vm145, 0.0
      %215 = vst.msk [vmem:[#allocation2 + $0x228] sm:$0xff] %vm145, 0.0
      %216 = vst.msk [vmem:[#allocation2 + $0x230] sm:$0xff] %vm145, 0.0
      %217 = vst.msk [vmem:[#allocation2 + $0x238] sm:$0xff] %vm145, 0.0
      %218 = vst.msk [vmem:[#allocation2 + $0x240] sm:$0xff] %vm145, 0.0
      %219 = vst.msk [vmem:[#allocation2 + $0x248] sm:$0xff] %vm145, 0.0
      %220 = vst.msk [vmem:[#allocation2 + $0x250] sm:$0xff] %vm145, 0.0
      %221 = vst.msk [vmem:[#allocation2 + $0x258] sm:$0xff] %vm145, 0.0
      %222 = vst.msk [vmem:[#allocation2 + $0x260] sm:$0xff] %vm145, 0.0
      %223 = vst.msk [vmem:[#allocation2 + $0x268] sm:$0xff] %vm145, 0.0
      %224 = vst.msk [vmem:[#allocation2 + $0x270] sm:$0xff] %vm145, 0.0
      %225 = vst.msk [vmem:[#allocation2 + $0x278] sm:$0xff] %vm145, 0.0
      %226 = vst.msk [vmem:[#allocation2 + $0x280] sm:$0xff] %vm145, 0.0
      %227 = vst.msk [vmem:[#allocation2 + $0x288] sm:$0xff] %vm145, 0.0
      %228 = vst.msk [vmem:[#allocation2 + $0x290] sm:$0xff] %vm145, 0.0
      %229 = vst.msk [vmem:[#allocation2 + $0x298] sm:$0xff] %vm145, 0.0
      %230 = vst.msk [vmem:[#allocation2 + $0x2a0] sm:$0xff] %vm145, 0.0
      %231 = vst.msk [vmem:[#allocation2 + $0x2a8] sm:$0xff] %vm145, 0.0
      %232 = vst.msk [vmem:[#allocation2 + $0x2b0] sm:$0xff] %vm145, 0.0
      %233 = vst.msk [vmem:[#allocation2 + $0x2b8] sm:$0xff] %vm145, 0.0
      %234 = vst.msk [vmem:[#allocation2 + $0x2c0] sm:$0xff] %vm145, 0.0
      %235 = vst.msk [vmem:[#allocation2 + $0x2c8] sm:$0xff] %vm145, 0.0
      %236 = vst.msk [vmem:[#allocation2 + $0x2d0] sm:$0xff] %vm145, 0.0
      %237 = vst.msk [vmem:[#allocation2 + $0x2d8] sm:$0xff] %vm145, 0.0
      %238 = vst.msk [vmem:[#allocation2 + $0x2e0] sm:$0xff] %vm145, 0.0
      %239 = vst.msk [vmem:[#allocation2 + $0x2e8] sm:$0xff] %vm145, 0.0
      %240 = vst.msk [vmem:[#allocation2 + $0x2f0] sm:$0xff] %vm145, 0.0
      %241 = vst.msk [vmem:[#allocation2 + $0x2f8] sm:$0xff] %vm145, 0.0
      %242 = vst.msk [vmem:[#allocation2 + $0x300] sm:$0xff] %vm145, 0.0
      %243 = vst.msk [vmem:[#allocation2 + $0x308] sm:$0xff] %vm145, 0.0
      %244 = vst.msk [vmem:[#allocation2 + $0x310] sm:$0xff] %vm145, 0.0
      %245 = vst.msk [vmem:[#allocation2 + $0x318] sm:$0xff] %vm145, 0.0
      %246 = vst.msk [vmem:[#allocation2 + $0x320] sm:$0xff] %vm145, 0.0
      %247 = vst.msk [vmem:[#allocation2 + $0x328] sm:$0xff] %vm145, 0.0
      %248 = vst.msk [vmem:[#allocation2 + $0x330] sm:$0xff] %vm145, 0.0
      %249 = vst.msk [vmem:[#allocation2 + $0x338] sm:$0xff] %vm145, 0.0
      %250 = vst.msk [vmem:[#allocation2 + $0x340] sm:$0xff] %vm145, 0.0
      %251 = vst.msk [vmem:[#allocation2 + $0x348] sm:$0xff] %vm145, 0.0
      %252 = vst.msk [vmem:[#allocation2 + $0x350] sm:$0xff] %vm145, 0.0
      %253 = vst.msk [vmem:[#allocation2 + $0x358] sm:$0xff] %vm145, 0.0
      %254 = vst.msk [vmem:[#allocation2 + $0x360] sm:$0xff] %vm145, 0.0
      %255 = vst.msk [vmem:[#allocation2 + $0x368] sm:$0xff] %vm145, 0.0
      %256 = vst.msk [vmem:[#allocation2 + $0x370] sm:$0xff] %vm145, 0.0
      %257 = vst.msk [vmem:[#allocation2 + $0x378] sm:$0xff] %vm145, 0.0
      %258 = vst.msk [vmem:[#allocation2 + $0x380] sm:$0xff] %vm145, 0.0
      %259 = vst.msk [vmem:[#allocation2 + $0x388] sm:$0xff] %vm145, 0.0
      %260 = vst.msk [vmem:[#allocation2 + $0x390] sm:$0xff] %vm145, 0.0
      %261 = vst.msk [vmem:[#allocation2 + $0x398] sm:$0xff] %vm145, 0.0
      %262 = vst.msk [vmem:[#allocation2 + $0x3a0] sm:$0xff] %vm145, 0.0
      %263 = vst.msk [vmem:[#allocation2 + $0x3a8] sm:$0xff] %vm145, 0.0
      %264 = vst.msk [vmem:[#allocation2 + $0x3b0] sm:$0xff] %vm145, 0.0
      %265 = vst.msk [vmem:[#allocation2 + $0x3b8] sm:$0xff] %vm145, 0.0
      %266 = vst.msk [vmem:[#allocation2 + $0x3c0] sm:$0xff] %vm145, 0.0
      %267 = vst.msk [vmem:[#allocation2 + $0x3c8] sm:$0xff] %vm145, 0.0
      %268 = vst.msk [vmem:[#allocation2 + $0x3d0] sm:$0xff] %vm145, 0.0
      %269 = vst.msk [vmem:[#allocation2 + $0x3d8] sm:$0xff] %vm145, 0.0
      %270 = vst.msk [vmem:[#allocation2 + $0x3e0] sm:$0xff] %vm145, 0.0
      %271 = vst.msk [vmem:[#allocation2 + $0x3e8] sm:$0xff] %vm145, 0.0
      %272 = vst.msk [vmem:[#allocation2 + $0x3f0] sm:$0xff] %vm145, 0.0
      %273 = vst.msk [vmem:[#allocation2 + $0x3f8] sm:$0xff] %vm145, 0.0
      %v274 = vld [vmem:[%s138] sm:$0xf]
      %v275 = vld [vmem:[%s138 + $0x4] sm:$0xf]
      %v276 = vld [vmem:[%s138 + $0x8] sm:$0xf]
      %v277 = vld [vmem:[%s138 + $0xc] sm:$0xf]
      %v278 = vld [vmem:[%s138 + $0x10] sm:$0xf]
      %v279 = vld [vmem:[%s138 + $0x14] sm:$0xf]
      %v280 = vld [vmem:[%s138 + $0x18] sm:$0xf]
      %v281 = vld [vmem:[%s138 + $0x1c] sm:$0xf]
      %v282 = vld [vmem:[%s138 + $0x20] sm:$0xf]
      %v283 = vld [vmem:[%s138 + $0x24] sm:$0xf]
      %v284 = vld [vmem:[%s138 + $0x28] sm:$0xf]
      %v285 = vld [vmem:[%s138 + $0x2c] sm:$0xf]
      %v286 = vld [vmem:[%s138 + $0x30] sm:$0xf]
      %v287 = vld [vmem:[%s138 + $0x34] sm:$0xf]
      %v288 = vld [vmem:[%s138 + $0x38] sm:$0xf]
      %v289 = vld [vmem:[%s138 + $0x3c] sm:$0xf]
      %v290 = vld [vmem:[%s138 + $0x40] sm:$0xf]
      %v291 = vld [vmem:[%s138 + $0x44] sm:$0xf]
      %v292 = vld [vmem:[%s138 + $0x48] sm:$0xf]
      %v293 = vld [vmem:[%s138 + $0x4c] sm:$0xf]
      %v294 = vld [vmem:[%s138 + $0x50] sm:$0xf]
      %v295 = vld [vmem:[%s138 + $0x54] sm:$0xf]
      %v296 = vld [vmem:[%s138 + $0x58] sm:$0xf]
      %v297 = vld [vmem:[%s138 + $0x5c] sm:$0xf]
      %v298 = vld [vmem:[%s138 + $0x60] sm:$0xf]
      %v299 = vld [vmem:[%s138 + $0x64] sm:$0xf]
      %v300 = vld [vmem:[%s138 + $0x68] sm:$0xf]
      %v301 = vld [vmem:[%s138 + $0x6c] sm:$0xf]
      %v302 = vld [vmem:[%s138 + $0x70] sm:$0xf]
      %v303 = vld [vmem:[%s138 + $0x74] sm:$0xf]
      %v304 = vld [vmem:[%s138 + $0x78] sm:$0xf]
      %v305 = vld [vmem:[%s138 + $0x7c] sm:$0xf]
      %v306 = vunpack.c.l.bf16 %v274
      %v307 = vunpack.c.l.bf16 %v275
      %v308 = vunpack.c.l.bf16 %v276
      %v309 = vunpack.c.l.bf16 %v277
      %v310 = vunpack.c.l.bf16 %v278
      %v311 = vunpack.c.l.bf16 %v279
      %v312 = vunpack.c.l.bf16 %v280
      %v313 = vunpack.c.l.bf16 %v281
      %v314 = vunpack.c.l.bf16 %v282
      %v315 = vunpack.c.l.bf16 %v283
      %v316 = vunpack.c.l.bf16 %v284
      %v317 = vunpack.c.l.bf16 %v285
      %v318 = vunpack.c.l.bf16 %v286
      %v319 = vunpack.c.l.bf16 %v287
      %v320 = vunpack.c.l.bf16 %v288
      %v321 = vunpack.c.l.bf16 %v289
      %v322 = vunpack.c.l.bf16 %v290
      %v323 = vunpack.c.l.bf16 %v291
      %v324 = vunpack.c.l.bf16 %v292
      %v325 = vunpack.c.l.bf16 %v293
      %v326 = vunpack.c.l.bf16 %v294
      %v327 = vunpack.c.l.bf16 %v295
      %v328 = vunpack.c.l.bf16 %v296
      %v329 = vunpack.c.l.bf16 %v297
      %v330 = vunpack.c.l.bf16 %v298
      %v331 = vunpack.c.l.bf16 %v299
      %v332 = vunpack.c.l.bf16 %v300
      %v333 = vunpack.c.l.bf16 %v301
      %v334 = vunpack.c.l.bf16 %v302
      %v335 = vunpack.c.l.bf16 %v303
      %v336 = vunpack.c.l.bf16 %v304
      %v337 = vunpack.c.l.bf16 %v305
      %s338 = scalar_lea.vmem [#allocation2], 256
      %339 = vst.msk [vmem:[%s338 + $0x8] sm:$0xff] %vm145, %v306
      %340 = vst.msk [vmem:[%s338 + $0x10] sm:$0xff] %vm145, %v307
      %341 = vst.msk [vmem:[%s338 + $0x28] sm:$0xff] %vm145, %v308
      %342 = vst.msk [vmem:[%s338 + $0x30] sm:$0xff] %vm145, %v309
      %343 = vst.msk [vmem:[%s338 + $0x48] sm:$0xff] %vm145, %v310
      %344 = vst.msk [vmem:[%s338 + $0x50] sm:$0xff] %vm145, %v311
      %345 = vst.msk [vmem:[%s338 + $0x68] sm:$0xff] %vm145, %v312
      %346 = vst.msk [vmem:[%s338 + $0x70] sm:$0xff] %vm145, %v313
      %347 = vst.msk [vmem:[%s338 + $0x88] sm:$0xff] %vm145, %v314
      %348 = vst.msk [vmem:[%s338 + $0x90] sm:$0xff] %vm145, %v315
      %349 = vst.msk [vmem:[%s338 + $0xa8] sm:$0xff] %vm145, %v316
      %350 = vst.msk [vmem:[%s338 + $0xb0] sm:$0xff] %vm145, %v317
      %351 = vst.msk [vmem:[%s338 + $0xc8] sm:$0xff] %vm145, %v318
      %352 = vst.msk [vmem:[%s338 + $0xd0] sm:$0xff] %vm145, %v319
      %353 = vst.msk [vmem:[%s338 + $0xe8] sm:$0xff] %vm145, %v320
      %354 = vst.msk [vmem:[%s338 + $0xf0] sm:$0xff] %vm145, %v321
      %355 = vst.msk [vmem:[%s338 + $0x108] sm:$0xff] %vm145, %v322
      %356 = vst.msk [vmem:[%s338 + $0x110] sm:$0xff] %vm145, %v323
      %357 = vst.msk [vmem:[%s338 + $0x128] sm:$0xff] %vm145, %v324
      %358 = vst.msk [vmem:[%s338 + $0x130] sm:$0xff] %vm145, %v325
      %359 = vst.msk [vmem:[%s338 + $0x148] sm:$0xff] %vm145, %v326
      %360 = vst.msk [vmem:[%s338 + $0x150] sm:$0xff] %vm145, %v327
      %361 = vst.msk [vmem:[%s338 + $0x168] sm:$0xff] %vm145, %v328
      %362 = vst.msk [vmem:[%s338 + $0x170] sm:$0xff] %vm145, %v329
      %363 = vst.msk [vmem:[%s338 + $0x188] sm:$0xff] %vm145, %v330
      %364 = vst.msk [vmem:[%s338 + $0x190] sm:$0xff] %vm145, %v331
      %365 = vst.msk [vmem:[%s338 + $0x1a8] sm:$0xff] %vm145, %v332
      %366 = vst.msk [vmem:[%s338 + $0x1b0] sm:$0xff] %vm145, %v333
      %367 = vst.msk [vmem:[%s338 + $0x1c8] sm:$0xff] %vm145, %v334
      %368 = vst.msk [vmem:[%s338 + $0x1d0] sm:$0xff] %vm145, %v335
      %369 = vst.msk [vmem:[%s338 + $0x1e8] sm:$0xff] %vm145, %v336
      %370 = vst.msk [vmem:[%s338 + $0x1f0] sm:$0xff] %vm145, %v337
      %s371 = scalar_lea.vmem [#allocation2], 224
      %v372 = vld [vmem:[%s371 + $0x7] sm:$0xff]
      %v373 = vld [vmem:[%s371 + $0xf] sm:$0xff]
      %v374 = vld [vmem:[%s371 + $0x27] sm:$0xff]
      %v375 = vld [vmem:[%s371 + $0x2f] sm:$0xff]
      %v376 = vld [vmem:[%s371 + $0x47] sm:$0xff]
      %v377 = vld [vmem:[%s371 + $0x4f] sm:$0xff]
      %v378 = vld [vmem:[%s371 + $0x67] sm:$0xff]
      %v379 = vld [vmem:[%s371 + $0x6f] sm:$0xff]
      %v380 = vld [vmem:[%s371 + $0x87] sm:$0xff]
      %v381 = vld [vmem:[%s371 + $0x8f] sm:$0xff]
      %v382 = vld [vmem:[%s371 + $0xa7] sm:$0xff]
      %v383 = vld [vmem:[%s371 + $0xaf] sm:$0xff]
      %v384 = vld [vmem:[%s371 + $0xc7] sm:$0xff]
      %v385 = vld [vmem:[%s371 + $0xcf] sm:$0xff]
      %v386 = vld [vmem:[%s371 + $0xe7] sm:$0xff]
      %v387 = vld [vmem:[%s371 + $0xef] sm:$0xff]
      %v388 = vld [vmem:[%s371 + $0x107] sm:$0xff]
      %v389 = vld [vmem:[%s371 + $0x10f] sm:$0xff]
      %v390 = vld [vmem:[%s371 + $0x127] sm:$0xff]
      %v391 = vld [vmem:[%s371 + $0x12f] sm:$0xff]
      %v392 = vld [vmem:[%s371 + $0x147] sm:$0xff]
      %v393 = vld [vmem:[%s371 + $0x14f] sm:$0xff]
      %v394 = vld [vmem:[%s371 + $0x167] sm:$0xff]
      %v395 = vld [vmem:[%s371 + $0x16f] sm:$0xff]
      %v396 = vld [vmem:[%s371 + $0x187] sm:$0xff]
      %v397 = vld [vmem:[%s371 + $0x18f] sm:$0xff]
      %v398 = vld [vmem:[%s371 + $0x1a7] sm:$0xff]
      %v399 = vld [vmem:[%s371 + $0x1af] sm:$0xff]
      %v400 = vld [vmem:[%s371 + $0x1c7] sm:$0xff]
      %v401 = vld [vmem:[%s371 + $0x1cf] sm:$0xff]
      %v402 = vld [vmem:[%s371 + $0x1e7] sm:$0xff]
      %v403 = vld [vmem:[%s371 + $0x1ef] sm:$0xff]
      %v404 = vld [vmem:[%s371 + $0x8] sm:$0xff]
      %v405 = vld [vmem:[%s371 + $0x10] sm:$0xff]
      %v406 = vld [vmem:[%s371 + $0x28] sm:$0xff]
      %v407 = vld [vmem:[%s371 + $0x30] sm:$0xff]
      %v408 = vld [vmem:[%s371 + $0x48] sm:$0xff]
      %v409 = vld [vmem:[%s371 + $0x50] sm:$0xff]
      %v410 = vld [vmem:[%s371 + $0x68] sm:$0xff]
      %v411 = vld [vmem:[%s371 + $0x70] sm:$0xff]
      %v412 = vld [vmem:[%s371 + $0x88] sm:$0xff]
      %v413 = vld [vmem:[%s371 + $0x90] sm:$0xff]
      %v414 = vld [vmem:[%s371 + $0xa8] sm:$0xff]
      %v415 = vld [vmem:[%s371 + $0xb0] sm:$0xff]
      %v416 = vld [vmem:[%s371 + $0xc8] sm:$0xff]
      %v417 = vld [vmem:[%s371 + $0xd0] sm:$0xff]
      %v418 = vld [vmem:[%s371 + $0xe8] sm:$0xff]
      %v419 = vld [vmem:[%s371 + $0xf0] sm:$0xff]
      %v420 = vld [vmem:[%s371 + $0x108] sm:$0xff]
      %v421 = vld [vmem:[%s371 + $0x110] sm:$0xff]
      %v422 = vld [vmem:[%s371 + $0x128] sm:$0xff]
      %v423 = vld [vmem:[%s371 + $0x130] sm:$0xff]
      %v424 = vld [vmem:[%s371 + $0x148] sm:$0xff]
      %v425 = vld [vmem:[%s371 + $0x150] sm:$0xff]
      %v426 = vld [vmem:[%s371 + $0x168] sm:$0xff]
      %v427 = vld [vmem:[%s371 + $0x170] sm:$0xff]
      %v428 = vld [vmem:[%s371 + $0x188] sm:$0xff]
      %v429 = vld [vmem:[%s371 + $0x190] sm:$0xff]
      %v430 = vld [vmem:[%s371 + $0x1a8] sm:$0xff]
      %v431 = vld [vmem:[%s371 + $0x1b0] sm:$0xff]
      %v432 = vld [vmem:[%s371 + $0x1c8] sm:$0xff]
      %v433 = vld [vmem:[%s371 + $0x1d0] sm:$0xff]
      %v434 = vld [vmem:[%s371 + $0x1e8] sm:$0xff]
      %v435 = vld [vmem:[%s371 + $0x1f0] sm:$0xff]
      %v436 = vld [vmem:[%s371 + $0x9] sm:$0xff]
      %v437 = vld [vmem:[%s371 + $0x11] sm:$0xff]
      %v438 = vld [vmem:[%s371 + $0x29] sm:$0xff]
      %v439 = vld [vmem:[%s371 + $0x31] sm:$0xff]
      %v440 = vld [vmem:[%s371 + $0x49] sm:$0xff]
      %v441 = vld [vmem:[%s371 + $0x51] sm:$0xff]
      %v442 = vld [vmem:[%s371 + $0x69] sm:$0xff]
      %v443 = vld [vmem:[%s371 + $0x71] sm:$0xff]
      %v444 = vld [vmem:[%s371 + $0x89] sm:$0xff]
      %v445 = vld [vmem:[%s371 + $0x91] sm:$0xff]
      %v446 = vld [vmem:[%s371 + $0xa9] sm:$0xff]
      %v447 = vld [vmem:[%s371 + $0xb1] sm:$0xff]
      %v448 = vld [vmem:[%s371 + $0xc9] sm:$0xff]
      %v449 = vld [vmem:[%s371 + $0xd1] sm:$0xff]
      %v450 = vld [vmem:[%s371 + $0xe9] sm:$0xff]
      %v451 = vld [vmem:[%s371 + $0xf1] sm:$0xff]
      %v452 = vld [vmem:[%s371 + $0x109] sm:$0xff]
      %v453 = vld [vmem:[%s371 + $0x111] sm:$0xff]
      %v454 = vld [vmem:[%s371 + $0x129] sm:$0xff]
      %v455 = vld [vmem:[%s371 + $0x131] sm:$0xff]
      %v456 = vld [vmem:[%s371 + $0x149] sm:$0xff]
      %v457 = vld [vmem:[%s371 + $0x151] sm:$0xff]
      %v458 = vld [vmem:[%s371 + $0x169] sm:$0xff]
      %v459 = vld [vmem:[%s371 + $0x171] sm:$0xff]
      %v460 = vld [vmem:[%s371 + $0x189] sm:$0xff]
      %v461 = vld [vmem:[%s371 + $0x191] sm:$0xff]
      %v462 = vld [vmem:[%s371 + $0x1a9] sm:$0xff]
      %v463 = vld [vmem:[%s371 + $0x1b1] sm:$0xff]
      %v464 = vld [vmem:[%s371 + $0x1c9] sm:$0xff]
      %v465 = vld [vmem:[%s371 + $0x1d1] sm:$0xff]
      %v466 = vld [vmem:[%s371 + $0x1e9] sm:$0xff]
      %v467 = vld [vmem:[%s371 + $0x1f1] sm:$0xff]
      %v468 = vld [vmem:[%s338 + $0x7] sm:$0xff]
      %v469 = vld [vmem:[%s338 + $0xf] sm:$0xff]
      %v470 = vld [vmem:[%s338 + $0x27] sm:$0xff]
      %v471 = vld [vmem:[%s338 + $0x2f] sm:$0xff]
      %v472 = vld [vmem:[%s338 + $0x47] sm:$0xff]
      %v473 = vld [vmem:[%s338 + $0x4f] sm:$0xff]
      %v474 = vld [vmem:[%s338 + $0x67] sm:$0xff]
      %v475 = vld [vmem:[%s338 + $0x6f] sm:$0xff]
      %v476 = vld [vmem:[%s338 + $0x87] sm:$0xff]
      %v477 = vld [vmem:[%s338 + $0x8f] sm:$0xff]
      %v478 = vld [vmem:[%s338 + $0xa7] sm:$0xff]
      %v479 = vld [vmem:[%s338 + $0xaf] sm:$0xff]
      %v480 = vld [vmem:[%s338 + $0xc7] sm:$0xff]
      %v481 = vld [vmem:[%s338 + $0xcf] sm:$0xff]
      %v482 = vld [vmem:[%s338 + $0xe7] sm:$0xff]
      %v483 = vld [vmem:[%s338 + $0xef] sm:$0xff]
      %v484 = vld [vmem:[%s338 + $0x107] sm:$0xff]
      %v485 = vld [vmem:[%s338 + $0x10f] sm:$0xff]
      %v486 = vld [vmem:[%s338 + $0x127] sm:$0xff]
      %v487 = vld [vmem:[%s338 + $0x12f] sm:$0xff]
      %v488 = vld [vmem:[%s338 + $0x147] sm:$0xff]
      %v489 = vld [vmem:[%s338 + $0x14f] sm:$0xff]
      %v490 = vld [vmem:[%s338 + $0x167] sm:$0xff]
      %v491 = vld [vmem:[%s338 + $0x16f] sm:$0xff]
      %v492 = vld [vmem:[%s338 + $0x187] sm:$0xff]
      %v493 = vld [vmem:[%s338 + $0x18f] sm:$0xff]
      %v494 = vld [vmem:[%s338 + $0x1a7] sm:$0xff]
      %v495 = vld [vmem:[%s338 + $0x1af] sm:$0xff]
      %v496 = vld [vmem:[%s338 + $0x1c7] sm:$0xff]
      %v497 = vld [vmem:[%s338 + $0x1cf] sm:$0xff]
      %v498 = vld [vmem:[%s338 + $0x1e7] sm:$0xff]
      %v499 = vld [vmem:[%s338 + $0x1ef] sm:$0xff]
      %v500 = vld [vmem:[%s338 + $0x8] sm:$0xff]
      %v501 = vld [vmem:[%s338 + $0x10] sm:$0xff]
      %v502 = vld [vmem:[%s338 + $0x28] sm:$0xff]
      %v503 = vld [vmem:[%s338 + $0x30] sm:$0xff]
      %v504 = vld [vmem:[%s338 + $0x48] sm:$0xff]
      %v505 = vld [vmem:[%s338 + $0x50] sm:$0xff]
      %v506 = vld [vmem:[%s338 + $0x68] sm:$0xff]
      %v507 = vld [vmem:[%s338 + $0x70] sm:$0xff]
      %v508 = vld [vmem:[%s338 + $0x88] sm:$0xff]
      %v509 = vld [vmem:[%s338 + $0x90] sm:$0xff]
      %v510 = vld [vmem:[%s338 + $0xa8] sm:$0xff]
      %v511 = vld [vmem:[%s338 + $0xb0] sm:$0xff]
      %v512 = vld [vmem:[%s338 + $0xc8] sm:$0xff]
      %v513 = vld [vmem:[%s338 + $0xd0] sm:$0xff]
      %v514 = vld [vmem:[%s338 + $0xe8] sm:$0xff]
      %v515 = vld [vmem:[%s338 + $0xf0] sm:$0xff]
      %v516 = vld [vmem:[%s338 + $0x108] sm:$0xff]
      %v517 = vld [vmem:[%s338 + $0x110] sm:$0xff]
      %v518 = vld [vmem:[%s338 + $0x128] sm:$0xff]
      %v519 = vld [vmem:[%s338 + $0x130] sm:$0xff]
      %v520 = vld [vmem:[%s338 + $0x148] sm:$0xff]
      %v521 = vld [vmem:[%s338 + $0x150] sm:$0xff]
      %v522 = vld [vmem:[%s338 + $0x168] sm:$0xff]
      %v523 = vld [vmem:[%s338 + $0x170] sm:$0xff]
      %v524 = vld [vmem:[%s338 + $0x188] sm:$0xff]
      %v525 = vld [vmem:[%s338 + $0x190] sm:$0xff]
      %v526 = vld [vmem:[%s338 + $0x1a8] sm:$0xff]
      %v527 = vld [vmem:[%s338 + $0x1b0] sm:$0xff]
      %v528 = vld [vmem:[%s338 + $0x1c8] sm:$0xff]
      %v529 = vld [vmem:[%s338 + $0x1d0] sm:$0xff]
      %v530 = vld [vmem:[%s338 + $0x1e8] sm:$0xff]
      %v531 = vld [vmem:[%s338 + $0x1f0] sm:$0xff]
      %v532 = vld [vmem:[%s338 + $0x9] sm:$0xff]
      %v533 = vld [vmem:[%s338 + $0x11] sm:$0xff]
      %v534 = vld [vmem:[%s338 + $0x29] sm:$0xff]
      %v535 = vld [vmem:[%s338 + $0x31] sm:$0xff]
      %v536 = vld [vmem:[%s338 + $0x49] sm:$0xff]
      %v537 = vld [vmem:[%s338 + $0x51] sm:$0xff]
      %v538 = vld [vmem:[%s338 + $0x69] sm:$0xff]
      %v539 = vld [vmem:[%s338 + $0x71] sm:$0xff]
      %v540 = vld [vmem:[%s338 + $0x89] sm:$0xff]
      %v541 = vld [vmem:[%s338 + $0x91] sm:$0xff]
      %v542 = vld [vmem:[%s338 + $0xa9] sm:$0xff]
      %v543 = vld [vmem:[%s338 + $0xb1] sm:$0xff]
      %v544 = vld [vmem:[%s338 + $0xc9] sm:$0xff]
      %v545 = vld [vmem:[%s338 + $0xd1] sm:$0xff]
      %v546 = vld [vmem:[%s338 + $0xe9] sm:$0xff]
      %v547 = vld [vmem:[%s338 + $0xf1] sm:$0xff]
      %v548 = vld [vmem:[%s338 + $0x109] sm:$0xff]
      %v549 = vld [vmem:[%s338 + $0x111] sm:$0xff]
      %v550 = vld [vmem:[%s338 + $0x129] sm:$0xff]
      %v551 = vld [vmem:[%s338 + $0x131] sm:$0xff]
      %v552 = vld [vmem:[%s338 + $0x149] sm:$0xff]
      %v553 = vld [vmem:[%s338 + $0x151] sm:$0xff]
      %v554 = vld [vmem:[%s338 + $0x169] sm:$0xff]
      %v555 = vld [vmem:[%s338 + $0x171] sm:$0xff]
      %v556 = vld [vmem:[%s338 + $0x189] sm:$0xff]
      %v557 = vld [vmem:[%s338 + $0x191] sm:$0xff]
      %v558 = vld [vmem:[%s338 + $0x1a9] sm:$0xff]
      %v559 = vld [vmem:[%s338 + $0x1b1] sm:$0xff]
      %v560 = vld [vmem:[%s338 + $0x1c9] sm:$0xff]
      %v561 = vld [vmem:[%s338 + $0x1d1] sm:$0xff]
      %v562 = vld [vmem:[%s338 + $0x1e9] sm:$0xff]
      %v563 = vld [vmem:[%s338 + $0x1f1] sm:$0xff]
      %s564 = scalar_lea.vmem [#allocation2], 288
      %v565 = vld [vmem:[%s564 + $0x7] sm:$0xff]
      %v566 = vld [vmem:[%s564 + $0xf] sm:$0xff]
      %v567 = vld [vmem:[%s564 + $0x27] sm:$0xff]
      %v568 = vld [vmem:[%s564 + $0x2f] sm:$0xff]
      %v569 = vld [vmem:[%s564 + $0x47] sm:$0xff]
      %v570 = vld [vmem:[%s564 + $0x4f] sm:$0xff]
      %v571 = vld [vmem:[%s564 + $0x67] sm:$0xff]
      %v572 = vld [vmem:[%s564 + $0x6f] sm:$0xff]
      %v573 = vld [vmem:[%s564 + $0x87] sm:$0xff]
      %v574 = vld [vmem:[%s564 + $0x8f] sm:$0xff]
      %v575 = vld [vmem:[%s564 + $0xa7] sm:$0xff]
      %v576 = vld [vmem:[%s564 + $0xaf] sm:$0xff]
      %v577 = vld [vmem:[%s564 + $0xc7] sm:$0xff]
      %v578 = vld [vmem:[%s564 + $0xcf] sm:$0xff]
      %v579 = vld [vmem:[%s564 + $0xe7] sm:$0xff]
      %v580 = vld [vmem:[%s564 + $0xef] sm:$0xff]
      %v581 = vld [vmem:[%s564 + $0x107] sm:$0xff]
      %v582 = vld [vmem:[%s564 + $0x10f] sm:$0xff]
      %v583 = vld [vmem:[%s564 + $0x127] sm:$0xff]
      %v584 = vld [vmem:[%s564 + $0x12f] sm:$0xff]
      %v585 = vld [vmem:[%s564 + $0x147] sm:$0xff]
      %v586 = vld [vmem:[%s564 + $0x14f] sm:$0xff]
      %v587 = vld [vmem:[%s564 + $0x167] sm:$0xff]
      %v588 = vld [vmem:[%s564 + $0x16f] sm:$0xff]
      %v589 = vld [vmem:[%s564 + $0x187] sm:$0xff]
      %v590 = vld [vmem:[%s564 + $0x18f] sm:$0xff]
      %v591 = vld [vmem:[%s564 + $0x1a7] sm:$0xff]
      %v592 = vld [vmem:[%s564 + $0x1af] sm:$0xff]
      %v593 = vld [vmem:[%s564 + $0x1c7] sm:$0xff]
      %v594 = vld [vmem:[%s564 + $0x1cf] sm:$0xff]
      %v595 = vld [vmem:[%s564 + $0x1e7] sm:$0xff]
      %v596 = vld [vmem:[%s564 + $0x1ef] sm:$0xff]
      %v597 = vld [vmem:[%s564 + $0x8] sm:$0xff]
      %v598 = vld [vmem:[%s564 + $0x10] sm:$0xff]
      %v599 = vld [vmem:[%s564 + $0x28] sm:$0xff]
      %v600 = vld [vmem:[%s564 + $0x30] sm:$0xff]
      %v601 = vld [vmem:[%s564 + $0x48] sm:$0xff]
      %v602 = vld [vmem:[%s564 + $0x50] sm:$0xff]
      %v603 = vld [vmem:[%s564 + $0x68] sm:$0xff]
      %v604 = vld [vmem:[%s564 + $0x70] sm:$0xff]
      %v605 = vld [vmem:[%s564 + $0x88] sm:$0xff]
      %v606 = vld [vmem:[%s564 + $0x90] sm:$0xff]
      %v607 = vld [vmem:[%s564 + $0xa8] sm:$0xff]
      %v608 = vld [vmem:[%s564 + $0xb0] sm:$0xff]
      %v609 = vld [vmem:[%s564 + $0xc8] sm:$0xff]
      %v610 = vld [vmem:[%s564 + $0xd0] sm:$0xff]
      %v611 = vld [vmem:[%s564 + $0xe8] sm:$0xff]
      %v612 = vld [vmem:[%s564 + $0xf0] sm:$0xff]
      %v613 = vld [vmem:[%s564 + $0x108] sm:$0xff]
      %v614 = vld [vmem:[%s564 + $0x110] sm:$0xff]
      %v615 = vld [vmem:[%s564 + $0x128] sm:$0xff]
      %v616 = vld [vmem:[%s564 + $0x130] sm:$0xff]
      %v617 = vld [vmem:[%s564 + $0x148] sm:$0xff]
      %v618 = vld [vmem:[%s564 + $0x150] sm:$0xff]
      %v619 = vld [vmem:[%s564 + $0x168] sm:$0xff]
      %v620 = vld [vmem:[%s564 + $0x170] sm:$0xff]
      %v621 = vld [vmem:[%s564 + $0x188] sm:$0xff]
      %v622 = vld [vmem:[%s564 + $0x190] sm:$0xff]
      %v623 = vld [vmem:[%s564 + $0x1a8] sm:$0xff]
      %v624 = vld [vmem:[%s564 + $0x1b0] sm:$0xff]
      %v625 = vld [vmem:[%s564 + $0x1c8] sm:$0xff]
      %v626 = vld [vmem:[%s564 + $0x1d0] sm:$0xff]
      %v627 = vld [vmem:[%s564 + $0x1e8] sm:$0xff]
      %v628 = vld [vmem:[%s564 + $0x1f0] sm:$0xff]
      %v629 = vld [vmem:[%s564 + $0x9] sm:$0xff]
      %v630 = vld [vmem:[%s564 + $0x11] sm:$0xff]
      %v631 = vld [vmem:[%s564 + $0x29] sm:$0xff]
      %v632 = vld [vmem:[%s564 + $0x31] sm:$0xff]
      %v633 = vld [vmem:[%s564 + $0x49] sm:$0xff]
      %v634 = vld [vmem:[%s564 + $0x51] sm:$0xff]
      %v635 = vld [vmem:[%s564 + $0x69] sm:$0xff]
      %v636 = vld [vmem:[%s564 + $0x71] sm:$0xff]
      %v637 = vld [vmem:[%s564 + $0x89] sm:$0xff]
      %v638 = vld [vmem:[%s564 + $0x91] sm:$0xff]
      %v639 = vld [vmem:[%s564 + $0xa9] sm:$0xff]
      %v640 = vld [vmem:[%s564 + $0xb1] sm:$0xff]
      %v641 = vld [vmem:[%s564 + $0xc9] sm:$0xff]
      %v642 = vld [vmem:[%s564 + $0xd1] sm:$0xff]
      %v643 = vld [vmem:[%s564 + $0xe9] sm:$0xff]
      %v644 = vld [vmem:[%s564 + $0xf1] sm:$0xff]
      %v645 = vld [vmem:[%s564 + $0x109] sm:$0xff]
      %v646 = vld [vmem:[%s564 + $0x111] sm:$0xff]
      %v647 = vld [vmem:[%s564 + $0x129] sm:$0xff]
      %v648 = vld [vmem:[%s564 + $0x131] sm:$0xff]
      %v649 = vld [vmem:[%s564 + $0x149] sm:$0xff]
      %v650 = vld [vmem:[%s564 + $0x151] sm:$0xff]
      %v651 = vld [vmem:[%s564 + $0x169] sm:$0xff]
      %v652 = vld [vmem:[%s564 + $0x171] sm:$0xff]
      %v653 = vld [vmem:[%s564 + $0x189] sm:$0xff]
      %v654 = vld [vmem:[%s564 + $0x191] sm:$0xff]
      %v655 = vld [vmem:[%s564 + $0x1a9] sm:$0xff]
      %v656 = vld [vmem:[%s564 + $0x1b1] sm:$0xff]
      %v657 = vld [vmem:[%s564 + $0x1c9] sm:$0xff]
      %v658 = vld [vmem:[%s564 + $0x1d1] sm:$0xff]
      %v659 = vld [vmem:[%s564 + $0x1e9] sm:$0xff]
      %v660 = vld [vmem:[%s564 + $0x1f1] sm:$0xff]
      %693 = vrot.lane.b32.xlu0 %v404, 4
      %v694 = vpop.permute.xlu0 %693
      %695 = vrot.lane.b32.xlu0 %v405, 4
      %v696 = vpop.permute.xlu0 %695
      %697 = vrot.lane.b32.xlu0 %v406, 4
      %v698 = vpop.permute.xlu0 %697
      %699 = vrot.lane.b32.xlu0 %v407, 4
      %v700 = vpop.permute.xlu0 %699
      %701 = vrot.lane.b32.xlu0 %v408, 4
      %v702 = vpop.permute.xlu0 %701
      %703 = vrot.lane.b32.xlu0 %v409, 4
      %v704 = vpop.permute.xlu0 %703
      %705 = vrot.lane.b32.xlu0 %v410, 4
      %v706 = vpop.permute.xlu0 %705
      %707 = vrot.lane.b32.xlu0 %v411, 4
      %v708 = vpop.permute.xlu0 %707
      %709 = vrot.lane.b32.xlu0 %v412, 4
      %v710 = vpop.permute.xlu0 %709
      %711 = vrot.lane.b32.xlu0 %v413, 4
      %v712 = vpop.permute.xlu0 %711
      %713 = vrot.lane.b32.xlu0 %v414, 4
      %v714 = vpop.permute.xlu0 %713
      %715 = vrot.lane.b32.xlu0 %v415, 4
      %v716 = vpop.permute.xlu0 %715
      %717 = vrot.lane.b32.xlu0 %v416, 4
      %v718 = vpop.permute.xlu0 %717
      %719 = vrot.lane.b32.xlu0 %v417, 4
      %v720 = vpop.permute.xlu0 %719
      %721 = vrot.lane.b32.xlu0 %v418, 4
      %v722 = vpop.permute.xlu0 %721
      %723 = vrot.lane.b32.xlu0 %v419, 4
      %v724 = vpop.permute.xlu0 %723
      %725 = vrot.lane.b32.xlu0 %v420, 4
      %v726 = vpop.permute.xlu0 %725
      %727 = vrot.lane.b32.xlu0 %v421, 4
      %v728 = vpop.permute.xlu0 %727
      %729 = vrot.lane.b32.xlu0 %v422, 4
      %v730 = vpop.permute.xlu0 %729
      %731 = vrot.lane.b32.xlu0 %v423, 4
      %v732 = vpop.permute.xlu0 %731
      %733 = vrot.lane.b32.xlu0 %v424, 4
      %v734 = vpop.permute.xlu0 %733
      %735 = vrot.lane.b32.xlu0 %v425, 4
      %v736 = vpop.permute.xlu0 %735
      %737 = vrot.lane.b32.xlu0 %v426, 4
      %v738 = vpop.permute.xlu0 %737
      %739 = vrot.lane.b32.xlu0 %v427, 4
      %v740 = vpop.permute.xlu0 %739
      %741 = vrot.lane.b32.xlu0 %v428, 4
      %v742 = vpop.permute.xlu0 %741
      %743 = vrot.lane.b32.xlu0 %v429, 4
      %v744 = vpop.permute.xlu0 %743
      %745 = vrot.lane.b32.xlu0 %v430, 4
      %v746 = vpop.permute.xlu0 %745
      %747 = vrot.lane.b32.xlu0 %v431, 4
      %v748 = vpop.permute.xlu0 %747
      %749 = vrot.lane.b32.xlu0 %v432, 4
      %v750 = vpop.permute.xlu0 %749
      %751 = vrot.lane.b32.xlu0 %v433, 4
      %v752 = vpop.permute.xlu0 %751
      %753 = vrot.lane.b32.xlu0 %v434, 4
      %v754 = vpop.permute.xlu0 %753
      %755 = vrot.lane.b32.xlu0 %v435, 4
      %v756 = vpop.permute.xlu0 %755
      %821 = vrot.lane.b32.xlu0 %v436, 8
      %v822 = vpop.permute.xlu0 %821
      %823 = vrot.lane.b32.xlu0 %v437, 8
      %v824 = vpop.permute.xlu0 %823
      %825 = vrot.lane.b32.xlu0 %v438, 8
      %v826 = vpop.permute.xlu0 %825
      %827 = vrot.lane.b32.xlu0 %v439, 8
      %v828 = vpop.permute.xlu0 %827
      %829 = vrot.lane.b32.xlu0 %v440, 8
      %v830 = vpop.permute.xlu0 %829
      %831 = vrot.lane.b32.xlu0 %v441, 8
      %v832 = vpop.permute.xlu0 %831
      %833 = vrot.lane.b32.xlu0 %v442, 8
      %v834 = vpop.permute.xlu0 %833
      %835 = vrot.lane.b32.xlu0 %v443, 8
      %v836 = vpop.permute.xlu0 %835
      %837 = vrot.lane.b32.xlu0 %v444, 8
      %v838 = vpop.permute.xlu0 %837
      %839 = vrot.lane.b32.xlu0 %v445, 8
      %v840 = vpop.permute.xlu0 %839
      %841 = vrot.lane.b32.xlu0 %v446, 8
      %v842 = vpop.permute.xlu0 %841
      %843 = vrot.lane.b32.xlu0 %v447, 8
      %v844 = vpop.permute.xlu0 %843
      %845 = vrot.lane.b32.xlu0 %v448, 8
      %v846 = vpop.permute.xlu0 %845
      %847 = vrot.lane.b32.xlu0 %v449, 8
      %v848 = vpop.permute.xlu0 %847
      %849 = vrot.lane.b32.xlu0 %v450, 8
      %v850 = vpop.permute.xlu0 %849
      %851 = vrot.lane.b32.xlu0 %v451, 8
      %v852 = vpop.permute.xlu0 %851
      %853 = vrot.lane.b32.xlu0 %v452, 8
      %v854 = vpop.permute.xlu0 %853
      %855 = vrot.lane.b32.xlu0 %v453, 8
      %v856 = vpop.permute.xlu0 %855
      %857 = vrot.lane.b32.xlu0 %v454, 8
      %v858 = vpop.permute.xlu0 %857
      %859 = vrot.lane.b32.xlu0 %v455, 8
      %v860 = vpop.permute.xlu0 %859
      %861 = vrot.lane.b32.xlu0 %v456, 8
      %v862 = vpop.permute.xlu0 %861
      %863 = vrot.lane.b32.xlu0 %v457, 8
      %v864 = vpop.permute.xlu0 %863
      %865 = vrot.lane.b32.xlu0 %v458, 8
      %v866 = vpop.permute.xlu0 %865
      %867 = vrot.lane.b32.xlu0 %v459, 8
      %v868 = vpop.permute.xlu0 %867
      %869 = vrot.lane.b32.xlu0 %v460, 8
      %v870 = vpop.permute.xlu0 %869
      %871 = vrot.lane.b32.xlu0 %v461, 8
      %v872 = vpop.permute.xlu0 %871
      %873 = vrot.lane.b32.xlu0 %v462, 8
      %v874 = vpop.permute.xlu0 %873
      %875 = vrot.lane.b32.xlu0 %v463, 8
      %v876 = vpop.permute.xlu0 %875
      %877 = vrot.lane.b32.xlu0 %v464, 8
      %v878 = vpop.permute.xlu0 %877
      %879 = vrot.lane.b32.xlu0 %v465, 8
      %v880 = vpop.permute.xlu0 %879
      %881 = vrot.lane.b32.xlu0 %v466, 8
      %v882 = vpop.permute.xlu0 %881
      %883 = vrot.lane.b32.xlu0 %v467, 8
      %v884 = vpop.permute.xlu0 %883
      %949 = vrot.lane.b32.xlu0 %v468, 12
      %v950 = vpop.permute.xlu0 %949
      %951 = vrot.lane.b32.xlu0 %v469, 12
      %v952 = vpop.permute.xlu0 %951
      %953 = vrot.lane.b32.xlu0 %v470, 12
      %v954 = vpop.permute.xlu0 %953
      %955 = vrot.lane.b32.xlu0 %v471, 12
      %v956 = vpop.permute.xlu0 %955
      %957 = vrot.lane.b32.xlu0 %v472, 12
      %v958 = vpop.permute.xlu0 %957
      %959 = vrot.lane.b32.xlu0 %v473, 12
      %v960 = vpop.permute.xlu0 %959
      %961 = vrot.lane.b32.xlu0 %v474, 12
      %v962 = vpop.permute.xlu0 %961
      %963 = vrot.lane.b32.xlu0 %v475, 12
      %v964 = vpop.permute.xlu0 %963
      %965 = vrot.lane.b32.xlu0 %v476, 12
      %v966 = vpop.permute.xlu0 %965
      %967 = vrot.lane.b32.xlu0 %v477, 12
      %v968 = vpop.permute.xlu0 %967
      %969 = vrot.lane.b32.xlu0 %v478, 12
      %v970 = vpop.permute.xlu0 %969
      %971 = vrot.lane.b32.xlu0 %v479, 12
      %v972 = vpop.permute.xlu0 %971
      %973 = vrot.lane.b32.xlu0 %v480, 12
      %v974 = vpop.permute.xlu0 %973
      %975 = vrot.lane.b32.xlu0 %v481, 12
      %v976 = vpop.permute.xlu0 %975
      %977 = vrot.lane.b32.xlu0 %v482, 12
      %v978 = vpop.permute.xlu0 %977
      %979 = vrot.lane.b32.xlu0 %v483, 12
      %v980 = vpop.permute.xlu0 %979
      %981 = vrot.lane.b32.xlu0 %v484, 12
      %v982 = vpop.permute.xlu0 %981
      %983 = vrot.lane.b32.xlu0 %v485, 12
      %v984 = vpop.permute.xlu0 %983
      %985 = vrot.lane.b32.xlu0 %v486, 12
      %v986 = vpop.permute.xlu0 %985
      %987 = vrot.lane.b32.xlu0 %v487, 12
      %v988 = vpop.permute.xlu0 %987
      %989 = vrot.lane.b32.xlu0 %v488, 12
      %v990 = vpop.permute.xlu0 %989
      %991 = vrot.lane.b32.xlu0 %v489, 12
      %v992 = vpop.permute.xlu0 %991
      %993 = vrot.lane.b32.xlu0 %v490, 12
      %v994 = vpop.permute.xlu0 %993
      %995 = vrot.lane.b32.xlu0 %v491, 12
      %v996 = vpop.permute.xlu0 %995
      %997 = vrot.lane.b32.xlu0 %v492, 12
      %v998 = vpop.permute.xlu0 %997
      %999 = vrot.lane.b32.xlu0 %v493, 12
      %v1000 = vpop.permute.xlu0 %999
      %1001 = vrot.lane.b32.xlu0 %v494, 12
      %v1002 = vpop.permute.xlu0 %1001
      %1003 = vrot.lane.b32.xlu0 %v495, 12
      %v1004 = vpop.permute.xlu0 %1003
      %1005 = vrot.lane.b32.xlu0 %v496, 12
      %v1006 = vpop.permute.xlu0 %1005
      %1007 = vrot.lane.b32.xlu0 %v497, 12
      %v1008 = vpop.permute.xlu0 %1007
      %1009 = vrot.lane.b32.xlu0 %v498, 12
      %v1010 = vpop.permute.xlu0 %1009
      %1011 = vrot.lane.b32.xlu0 %v499, 12
      %v1012 = vpop.permute.xlu0 %1011
      %1077 = vrot.lane.b32.xlu0 %v500, 16
      %v1078 = vpop.permute.xlu0 %1077
      %1079 = vrot.lane.b32.xlu0 %v501, 16
      %v1080 = vpop.permute.xlu0 %1079
      %1081 = vrot.lane.b32.xlu0 %v502, 16
      %v1082 = vpop.permute.xlu0 %1081
      %1083 = vrot.lane.b32.xlu0 %v503, 16
      %v1084 = vpop.permute.xlu0 %1083
      %1085 = vrot.lane.b32.xlu0 %v504, 16
      %v1086 = vpop.permute.xlu0 %1085
      %1087 = vrot.lane.b32.xlu0 %v505, 16
      %v1088 = vpop.permute.xlu0 %1087
      %1089 = vrot.lane.b32.xlu0 %v506, 16
      %v1090 = vpop.permute.xlu0 %1089
      %1091 = vrot.lane.b32.xlu0 %v507, 16
      %v1092 = vpop.permute.xlu0 %1091
      %1093 = vrot.lane.b32.xlu0 %v508, 16
      %v1094 = vpop.permute.xlu0 %1093
      %1095 = vrot.lane.b32.xlu0 %v509, 16
      %v1096 = vpop.permute.xlu0 %1095
      %1097 = vrot.lane.b32.xlu0 %v510, 16
      %v1098 = vpop.permute.xlu0 %1097
      %1099 = vrot.lane.b32.xlu0 %v511, 16
      %v1100 = vpop.permute.xlu0 %1099
      %1101 = vrot.lane.b32.xlu0 %v512, 16
      %v1102 = vpop.permute.xlu0 %1101
      %1103 = vrot.lane.b32.xlu0 %v513, 16
      %v1104 = vpop.permute.xlu0 %1103
      %1105 = vrot.lane.b32.xlu0 %v514, 16
      %v1106 = vpop.permute.xlu0 %1105
      %1107 = vrot.lane.b32.xlu0 %v515, 16
      %v1108 = vpop.permute.xlu0 %1107
      %1109 = vrot.lane.b32.xlu0 %v516, 16
      %v1110 = vpop.permute.xlu0 %1109
      %1111 = vrot.lane.b32.xlu0 %v517, 16
      %v1112 = vpop.permute.xlu0 %1111
      %1113 = vrot.lane.b32.xlu0 %v518, 16
      %v1114 = vpop.permute.xlu0 %1113
      %1115 = vrot.lane.b32.xlu0 %v519, 16
      %v1116 = vpop.permute.xlu0 %1115
      %1117 = vrot.lane.b32.xlu0 %v520, 16
      %v1118 = vpop.permute.xlu0 %1117
      %1119 = vrot.lane.b32.xlu0 %v521, 16
      %v1120 = vpop.permute.xlu0 %1119
      %1121 = vrot.lane.b32.xlu0 %v522, 16
      %v1122 = vpop.permute.xlu0 %1121
      %1123 = vrot.lane.b32.xlu0 %v523, 16
      %v1124 = vpop.permute.xlu0 %1123
      %1125 = vrot.lane.b32.xlu0 %v524, 16
      %v1126 = vpop.permute.xlu0 %1125
      %1127 = vrot.lane.b32.xlu0 %v525, 16
      %v1128 = vpop.permute.xlu0 %1127
      %1129 = vrot.lane.b32.xlu0 %v526, 16
      %v1130 = vpop.permute.xlu0 %1129
      %1131 = vrot.lane.b32.xlu0 %v527, 16
      %v1132 = vpop.permute.xlu0 %1131
      %1133 = vrot.lane.b32.xlu0 %v528, 16
      %v1134 = vpop.permute.xlu0 %1133
      %1135 = vrot.lane.b32.xlu0 %v529, 16
      %v1136 = vpop.permute.xlu0 %1135
      %1137 = vrot.lane.b32.xlu0 %v530, 16
      %v1138 = vpop.permute.xlu0 %1137
      %1139 = vrot.lane.b32.xlu0 %v531, 16
      %v1140 = vpop.permute.xlu0 %1139
      %1205 = vrot.lane.b32.xlu0 %v532, 20
      %v1206 = vpop.permute.xlu0 %1205
      %1207 = vrot.lane.b32.xlu0 %v533, 20
      %v1208 = vpop.permute.xlu0 %1207
      %1209 = vrot.lane.b32.xlu0 %v534, 20
      %v1210 = vpop.permute.xlu0 %1209
      %1211 = vrot.lane.b32.xlu0 %v535, 20
      %v1212 = vpop.permute.xlu0 %1211
      %1213 = vrot.lane.b32.xlu0 %v536, 20
      %v1214 = vpop.permute.xlu0 %1213
      %1215 = vrot.lane.b32.xlu0 %v537, 20
      %v1216 = vpop.permute.xlu0 %1215
      %1217 = vrot.lane.b32.xlu0 %v538, 20
      %v1218 = vpop.permute.xlu0 %1217
      %1219 = vrot.lane.b32.xlu0 %v539, 20
      %v1220 = vpop.permute.xlu0 %1219
      %1221 = vrot.lane.b32.xlu0 %v540, 20
      %v1222 = vpop.permute.xlu0 %1221
      %1223 = vrot.lane.b32.xlu0 %v541, 20
      %v1224 = vpop.permute.xlu0 %1223
      %1225 = vrot.lane.b32.xlu0 %v542, 20
      %v1226 = vpop.permute.xlu0 %1225
      %1227 = vrot.lane.b32.xlu0 %v543, 20
      %v1228 = vpop.permute.xlu0 %1227
      %1229 = vrot.lane.b32.xlu0 %v544, 20
      %v1230 = vpop.permute.xlu0 %1229
      %1231 = vrot.lane.b32.xlu0 %v545, 20
      %v1232 = vpop.permute.xlu0 %1231
      %1233 = vrot.lane.b32.xlu0 %v546, 20
      %v1234 = vpop.permute.xlu0 %1233
      %1235 = vrot.lane.b32.xlu0 %v547, 20
      %v1236 = vpop.permute.xlu0 %1235
      %1237 = vrot.lane.b32.xlu0 %v548, 20
      %v1238 = vpop.permute.xlu0 %1237
      %1239 = vrot.lane.b32.xlu0 %v549, 20
      %v1240 = vpop.permute.xlu0 %1239
      %1241 = vrot.lane.b32.xlu0 %v550, 20
      %v1242 = vpop.permute.xlu0 %1241
      %1243 = vrot.lane.b32.xlu0 %v551, 20
      %v1244 = vpop.permute.xlu0 %1243
      %1245 = vrot.lane.b32.xlu0 %v552, 20
      %v1246 = vpop.permute.xlu0 %1245
      %1247 = vrot.lane.b32.xlu0 %v553, 20
      %v1248 = vpop.permute.xlu0 %1247
      %1249 = vrot.lane.b32.xlu0 %v554, 20
      %v1250 = vpop.permute.xlu0 %1249
      %1251 = vrot.lane.b32.xlu0 %v555, 20
      %v1252 = vpop.permute.xlu0 %1251
      %1253 = vrot.lane.b32.xlu0 %v556, 20
      %v1254 = vpop.permute.xlu0 %1253
      %1255 = vrot.lane.b32.xlu0 %v557, 20
      %v1256 = vpop.permute.xlu0 %1255
      %1257 = vrot.lane.b32.xlu0 %v558, 20
      %v1258 = vpop.permute.xlu0 %1257
      %1259 = vrot.lane.b32.xlu0 %v559, 20
      %v1260 = vpop.permute.xlu0 %1259
      %1261 = vrot.lane.b32.xlu0 %v560, 20
      %v1262 = vpop.permute.xlu0 %1261
      %1263 = vrot.lane.b32.xlu0 %v561, 20
      %v1264 = vpop.permute.xlu0 %1263
      %1265 = vrot.lane.b32.xlu0 %v562, 20
      %v1266 = vpop.permute.xlu0 %1265
      %1267 = vrot.lane.b32.xlu0 %v563, 20
      %v1268 = vpop.permute.xlu0 %1267
      %1333 = vrot.lane.b32.xlu0 %v565, 24
      %v1334 = vpop.permute.xlu0 %1333
      %1335 = vrot.lane.b32.xlu0 %v566, 24
      %v1336 = vpop.permute.xlu0 %1335
      %1337 = vrot.lane.b32.xlu0 %v567, 24
      %v1338 = vpop.permute.xlu0 %1337
      %1339 = vrot.lane.b32.xlu0 %v568, 24
      %v1340 = vpop.permute.xlu0 %1339
      %1341 = vrot.lane.b32.xlu0 %v569, 24
      %v1342 = vpop.permute.xlu0 %1341
      %1343 = vrot.lane.b32.xlu0 %v570, 24
      %v1344 = vpop.permute.xlu0 %1343
      %1345 = vrot.lane.b32.xlu0 %v571, 24
      %v1346 = vpop.permute.xlu0 %1345
      %1347 = vrot.lane.b32.xlu0 %v572, 24
      %v1348 = vpop.permute.xlu0 %1347
      %1349 = vrot.lane.b32.xlu0 %v573, 24
      %v1350 = vpop.permute.xlu0 %1349
      %1351 = vrot.lane.b32.xlu0 %v574, 24
      %v1352 = vpop.permute.xlu0 %1351
      %1353 = vrot.lane.b32.xlu0 %v575, 24
      %v1354 = vpop.permute.xlu0 %1353
      %1355 = vrot.lane.b32.xlu0 %v576, 24
      %v1356 = vpop.permute.xlu0 %1355
      %1357 = vrot.lane.b32.xlu0 %v577, 24
      %v1358 = vpop.permute.xlu0 %1357
      %1359 = vrot.lane.b32.xlu0 %v578, 24
      %v1360 = vpop.permute.xlu0 %1359
      %1361 = vrot.lane.b32.xlu0 %v579, 24
      %v1362 = vpop.permute.xlu0 %1361
      %1363 = vrot.lane.b32.xlu0 %v580, 24
      %v1364 = vpop.permute.xlu0 %1363
      %1365 = vrot.lane.b32.xlu0 %v581, 24
      %v1366 = vpop.permute.xlu0 %1365
      %1367 = vrot.lane.b32.xlu0 %v582, 24
      %v1368 = vpop.permute.xlu0 %1367
      %1369 = vrot.lane.b32.xlu0 %v583, 24
      %v1370 = vpop.permute.xlu0 %1369
      %1371 = vrot.lane.b32.xlu0 %v584, 24
      %v1372 = vpop.permute.xlu0 %1371
      %1373 = vrot.lane.b32.xlu0 %v585, 24
      %v1374 = vpop.permute.xlu0 %1373
      %1375 = vrot.lane.b32.xlu0 %v586, 24
      %v1376 = vpop.permute.xlu0 %1375
      %1377 = vrot.lane.b32.xlu0 %v587, 24
      %v1378 = vpop.permute.xlu0 %1377
      %1379 = vrot.lane.b32.xlu0 %v588, 24
      %v1380 = vpop.permute.xlu0 %1379
      %1381 = vrot.lane.b32.xlu0 %v589, 24
      %v1382 = vpop.permute.xlu0 %1381
      %1383 = vrot.lane.b32.xlu0 %v590, 24
      %v1384 = vpop.permute.xlu0 %1383
      %1385 = vrot.lane.b32.xlu0 %v591, 24
      %v1386 = vpop.permute.xlu0 %1385
      %1387 = vrot.lane.b32.xlu0 %v592, 24
      %v1388 = vpop.permute.xlu0 %1387
      %1389 = vrot.lane.b32.xlu0 %v593, 24
      %v1390 = vpop.permute.xlu0 %1389
      %1391 = vrot.lane.b32.xlu0 %v594, 24
      %v1392 = vpop.permute.xlu0 %1391
      %1393 = vrot.lane.b32.xlu0 %v595, 24
      %v1394 = vpop.permute.xlu0 %1393
      %1395 = vrot.lane.b32.xlu0 %v596, 24
      %v1396 = vpop.permute.xlu0 %1395
      %1461 = vrot.lane.b32.xlu0 %v597, 28
      %v1462 = vpop.permute.xlu0 %1461
      %1463 = vrot.lane.b32.xlu0 %v598, 28
      %v1464 = vpop.permute.xlu0 %1463
      %1465 = vrot.lane.b32.xlu0 %v599, 28
      %v1466 = vpop.permute.xlu0 %1465
      %1467 = vrot.lane.b32.xlu0 %v600, 28
      %v1468 = vpop.permute.xlu0 %1467
      %1469 = vrot.lane.b32.xlu0 %v601, 28
      %v1470 = vpop.permute.xlu0 %1469
      %1471 = vrot.lane.b32.xlu0 %v602, 28
      %v1472 = vpop.permute.xlu0 %1471
      %1473 = vrot.lane.b32.xlu0 %v603, 28
      %v1474 = vpop.permute.xlu0 %1473
      %1475 = vrot.lane.b32.xlu0 %v604, 28
      %v1476 = vpop.permute.xlu0 %1475
      %1477 = vrot.lane.b32.xlu0 %v605, 28
      %v1478 = vpop.permute.xlu0 %1477
      %1479 = vrot.lane.b32.xlu0 %v606, 28
      %v1480 = vpop.permute.xlu0 %1479
      %1481 = vrot.lane.b32.xlu0 %v607, 28
      %v1482 = vpop.permute.xlu0 %1481
      %1483 = vrot.lane.b32.xlu0 %v608, 28
      %v1484 = vpop.permute.xlu0 %1483
      %1485 = vrot.lane.b32.xlu0 %v609, 28
      %v1486 = vpop.permute.xlu0 %1485
      %1487 = vrot.lane.b32.xlu0 %v610, 28
      %v1488 = vpop.permute.xlu0 %1487
      %1489 = vrot.lane.b32.xlu0 %v611, 28
      %v1490 = vpop.permute.xlu0 %1489
      %1491 = vrot.lane.b32.xlu0 %v612, 28
      %v1492 = vpop.permute.xlu0 %1491
      %1493 = vrot.lane.b32.xlu0 %v613, 28
      %v1494 = vpop.permute.xlu0 %1493
      %1495 = vrot.lane.b32.xlu0 %v614, 28
      %v1496 = vpop.permute.xlu0 %1495
      %1497 = vrot.lane.b32.xlu0 %v615, 28
      %v1498 = vpop.permute.xlu0 %1497
      %1499 = vrot.lane.b32.xlu0 %v616, 28
      %v1500 = vpop.permute.xlu0 %1499
      %1501 = vrot.lane.b32.xlu0 %v617, 28
      %v1502 = vpop.permute.xlu0 %1501
      %1503 = vrot.lane.b32.xlu0 %v618, 28
      %v1504 = vpop.permute.xlu0 %1503
      %1505 = vrot.lane.b32.xlu0 %v619, 28
      %v1506 = vpop.permute.xlu0 %1505
      %1507 = vrot.lane.b32.xlu0 %v620, 28
      %v1508 = vpop.permute.xlu0 %1507
      %1509 = vrot.lane.b32.xlu0 %v621, 28
      %v1510 = vpop.permute.xlu0 %1509
      %1511 = vrot.lane.b32.xlu0 %v622, 28
      %v1512 = vpop.permute.xlu0 %1511
      %1513 = vrot.lane.b32.xlu0 %v623, 28
      %v1514 = vpop.permute.xlu0 %1513
      %1515 = vrot.lane.b32.xlu0 %v624, 28
      %v1516 = vpop.permute.xlu0 %1515
      %1517 = vrot.lane.b32.xlu0 %v625, 28
      %v1518 = vpop.permute.xlu0 %1517
      %1519 = vrot.lane.b32.xlu0 %v626, 28
      %v1520 = vpop.permute.xlu0 %1519
      %1521 = vrot.lane.b32.xlu0 %v627, 28
      %v1522 = vpop.permute.xlu0 %1521
      %1523 = vrot.lane.b32.xlu0 %v628, 28
      %v1524 = vpop.permute.xlu0 %1523
      %1589 = vrot.lane.b32.xlu0 %v629, 32
      %v1590 = vpop.permute.xlu0 %1589
      %1591 = vrot.lane.b32.xlu0 %v630, 32
      %v1592 = vpop.permute.xlu0 %1591
      %1593 = vrot.lane.b32.xlu0 %v631, 32
      %v1594 = vpop.permute.xlu0 %1593
      %1595 = vrot.lane.b32.xlu0 %v632, 32
      %v1596 = vpop.permute.xlu0 %1595
      %1597 = vrot.lane.b32.xlu0 %v633, 32
      %v1598 = vpop.permute.xlu0 %1597
      %1599 = vrot.lane.b32.xlu0 %v634, 32
      %v1600 = vpop.permute.xlu0 %1599
      %1601 = vrot.lane.b32.xlu0 %v635, 32
      %v1602 = vpop.permute.xlu0 %1601
      %1603 = vrot.lane.b32.xlu0 %v636, 32
      %v1604 = vpop.permute.xlu0 %1603
      %1605 = vrot.lane.b32.xlu0 %v637, 32
      %v1606 = vpop.permute.xlu0 %1605
      %1607 = vrot.lane.b32.xlu0 %v638, 32
      %v1608 = vpop.permute.xlu0 %1607
      %1609 = vrot.lane.b32.xlu0 %v639, 32
      %v1610 = vpop.permute.xlu0 %1609
      %1611 = vrot.lane.b32.xlu0 %v640, 32
      %v1612 = vpop.permute.xlu0 %1611
      %1613 = vrot.lane.b32.xlu0 %v641, 32
      %v1614 = vpop.permute.xlu0 %1613
      %1615 = vrot.lane.b32.xlu0 %v642, 32
      %v1616 = vpop.permute.xlu0 %1615
      %1617 = vrot.lane.b32.xlu0 %v643, 32
      %v1618 = vpop.permute.xlu0 %1617
      %1619 = vrot.lane.b32.xlu0 %v644, 32
      %v1620 = vpop.permute.xlu0 %1619
      %1621 = vrot.lane.b32.xlu0 %v645, 32
      %v1622 = vpop.permute.xlu0 %1621
      %1623 = vrot.lane.b32.xlu0 %v646, 32
      %v1624 = vpop.permute.xlu0 %1623
      %1625 = vrot.lane.b32.xlu0 %v647, 32
      %v1626 = vpop.permute.xlu0 %1625
      %1627 = vrot.lane.b32.xlu0 %v648, 32
      %v1628 = vpop.permute.xlu0 %1627
      %1629 = vrot.lane.b32.xlu0 %v649, 32
      %v1630 = vpop.permute.xlu0 %1629
      %1631 = vrot.lane.b32.xlu0 %v650, 32
      %v1632 = vpop.permute.xlu0 %1631
      %1633 = vrot.lane.b32.xlu0 %v651, 32
      %v1634 = vpop.permute.xlu0 %1633
      %1635 = vrot.lane.b32.xlu0 %v652, 32
      %v1636 = vpop.permute.xlu0 %1635
      %1637 = vrot.lane.b32.xlu0 %v653, 32
      %v1638 = vpop.permute.xlu0 %1637
      %1639 = vrot.lane.b32.xlu0 %v654, 32
      %v1640 = vpop.permute.xlu0 %1639
      %1641 = vrot.lane.b32.xlu0 %v655, 32
      %v1642 = vpop.permute.xlu0 %1641
      %1643 = vrot.lane.b32.xlu0 %v656, 32
      %v1644 = vpop.permute.xlu0 %1643
      %1645 = vrot.lane.b32.xlu0 %v657, 32
      %v1646 = vpop.permute.xlu0 %1645
      %1647 = vrot.lane.b32.xlu0 %v658, 32
      %v1648 = vpop.permute.xlu0 %1647
      %1649 = vrot.lane.b32.xlu0 %v659, 32
      %v1650 = vpop.permute.xlu0 %1649
      %1651 = vrot.lane.b32.xlu0 %v660, 32
      %v1652 = vpop.permute.xlu0 %1651
      %v1685 = vsel %vm145, %v372, %v694
      %v1686 = vsel %vm145, %v373, %v696
      %v1687 = vsel %vm145, %v374, %v698
      %v1688 = vsel %vm145, %v375, %v700
      %v1689 = vsel %vm145, %v376, %v702
      %v1690 = vsel %vm145, %v377, %v704
      %v1691 = vsel %vm145, %v378, %v706
      %v1692 = vsel %vm145, %v379, %v708
      %v1693 = vsel %vm145, %v380, %v710
      %v1694 = vsel %vm145, %v381, %v712
      %v1695 = vsel %vm145, %v382, %v714
      %v1696 = vsel %vm145, %v383, %v716
      %v1697 = vsel %vm145, %v384, %v718
      %v1698 = vsel %vm145, %v385, %v720
      %v1699 = vsel %vm145, %v386, %v722
      %v1700 = vsel %vm145, %v387, %v724
      %v1701 = vsel %vm145, %v388, %v726
      %v1702 = vsel %vm145, %v389, %v728
      %v1703 = vsel %vm145, %v390, %v730
      %v1704 = vsel %vm145, %v391, %v732
      %v1705 = vsel %vm145, %v392, %v734
      %v1706 = vsel %vm145, %v393, %v736
      %v1707 = vsel %vm145, %v394, %v738
      %v1708 = vsel %vm145, %v395, %v740
      %v1709 = vsel %vm145, %v396, %v742
      %v1710 = vsel %vm145, %v397, %v744
      %v1711 = vsel %vm145, %v398, %v746
      %v1712 = vsel %vm145, %v399, %v748
      %v1713 = vsel %vm145, %v400, %v750
      %v1714 = vsel %vm145, %v401, %v752
      %v1715 = vsel %vm145, %v402, %v754
      %v1716 = vsel %vm145, %v403, %v756
      %vm1717 = vcmask 64512
      %v1718 = vsel %vm1717, %v1685, %v822
      %v1719 = vsel %vm1717, %v1686, %v824
      %v1720 = vsel %vm1717, %v1687, %v826
      %v1721 = vsel %vm1717, %v1688, %v828
      %v1722 = vsel %vm1717, %v1689, %v830
      %v1723 = vsel %vm1717, %v1690, %v832
      %v1724 = vsel %vm1717, %v1691, %v834
      %v1725 = vsel %vm1717, %v1692, %v836
      %v1726 = vsel %vm1717, %v1693, %v838
      %v1727 = vsel %vm1717, %v1694, %v840
      %v1728 = vsel %vm1717, %v1695, %v842
      %v1729 = vsel %vm1717, %v1696, %v844
      %v1730 = vsel %vm1717, %v1697, %v846
      %v1731 = vsel %vm1717, %v1698, %v848
      %v1732 = vsel %vm1717, %v1699, %v850
      %v1733 = vsel %vm1717, %v1700, %v852
      %v1734 = vsel %vm1717, %v1701, %v854
      %v1735 = vsel %vm1717, %v1702, %v856
      %v1736 = vsel %vm1717, %v1703, %v858
      %v1737 = vsel %vm1717, %v1704, %v860
      %v1738 = vsel %vm1717, %v1705, %v862
      %v1739 = vsel %vm1717, %v1706, %v864
      %v1740 = vsel %vm1717, %v1707, %v866
      %v1741 = vsel %vm1717, %v1708, %v868
      %v1742 = vsel %vm1717, %v1709, %v870
      %v1743 = vsel %vm1717, %v1710, %v872
      %v1744 = vsel %vm1717, %v1711, %v874
      %v1745 = vsel %vm1717, %v1712, %v876
      %v1746 = vsel %vm1717, %v1713, %v878
      %v1747 = vsel %vm1717, %v1714, %v880
      %v1748 = vsel %vm1717, %v1715, %v882
      %v1749 = vsel %vm1717, %v1716, %v884
      %vm1750 = vcmask 97280
      %v1751 = vsel %vm1750, %v1718, %v950
      %v1752 = vsel %vm1750, %v1719, %v952
      %v1753 = vsel %vm1750, %v1720, %v954
      %v1754 = vsel %vm1750, %v1721, %v956
      %v1755 = vsel %vm1750, %v1722, %v958
      %v1756 = vsel %vm1750, %v1723, %v960
      %v1757 = vsel %vm1750, %v1724, %v962
      %v1758 = vsel %vm1750, %v1725, %v964
      %v1759 = vsel %vm1750, %v1726, %v966
      %v1760 = vsel %vm1750, %v1727, %v968
      %v1761 = vsel %vm1750, %v1728, %v970
      %v1762 = vsel %vm1750, %v1729, %v972
      %v1763 = vsel %vm1750, %v1730, %v974
      %v1764 = vsel %vm1750, %v1731, %v976
      %v1765 = vsel %vm1750, %v1732, %v978
      %v1766 = vsel %vm1750, %v1733, %v980
      %v1767 = vsel %vm1750, %v1734, %v982
      %v1768 = vsel %vm1750, %v1735, %v984
      %v1769 = vsel %vm1750, %v1736, %v986
      %v1770 = vsel %vm1750, %v1737, %v988
      %v1771 = vsel %vm1750, %v1738, %v990
      %v1772 = vsel %vm1750, %v1739, %v992
      %v1773 = vsel %vm1750, %v1740, %v994
      %v1774 = vsel %vm1750, %v1741, %v996
      %v1775 = vsel %vm1750, %v1742, %v998
      %v1776 = vsel %vm1750, %v1743, %v1000
      %v1777 = vsel %vm1750, %v1744, %v1002
      %v1778 = vsel %vm1750, %v1745, %v1004
      %v1779 = vsel %vm1750, %v1746, %v1006
      %v1780 = vsel %vm1750, %v1747, %v1008
      %v1781 = vsel %vm1750, %v1748, %v1010
      %v1782 = vsel %vm1750, %v1749, %v1012
      %vm1783 = vcmask 130048
      %v1784 = vsel %vm1783, %v1751, %v1078
      %v1785 = vsel %vm1783, %v1752, %v1080
      %v1786 = vsel %vm1783, %v1753, %v1082
      %v1787 = vsel %vm1783, %v1754, %v1084
      %v1788 = vsel %vm1783, %v1755, %v1086
      %v1789 = vsel %vm1783, %v1756, %v1088
      %v1790 = vsel %vm1783, %v1757, %v1090
      %v1791 = vsel %vm1783, %v1758, %v1092
      %v1792 = vsel %vm1783, %v1759, %v1094
      %v1793 = vsel %vm1783, %v1760, %v1096
      %v1794 = vsel %vm1783, %v1761, %v1098
      %v1795 = vsel %vm1783, %v1762, %v1100
      %v1796 = vsel %vm1783, %v1763, %v1102
      %v1797 = vsel %vm1783, %v1764, %v1104
      %v1798 = vsel %vm1783, %v1765, %v1106
      %v1799 = vsel %vm1783, %v1766, %v1108
      %v1800 = vsel %vm1783, %v1767, %v1110
      %v1801 = vsel %vm1783, %v1768, %v1112
      %v1802 = vsel %vm1783, %v1769, %v1114
      %v1803 = vsel %vm1783, %v1770, %v1116
      %v1804 = vsel %vm1783, %v1771, %v1118
      %v1805 = vsel %vm1783, %v1772, %v1120
      %v1806 = vsel %vm1783, %v1773, %v1122
      %v1807 = vsel %vm1783, %v1774, %v1124
      %v1808 = vsel %vm1783, %v1775, %v1126
      %v1809 = vsel %vm1783, %v1776, %v1128
      %v1810 = vsel %vm1783, %v1777, %v1130
      %v1811 = vsel %vm1783, %v1778, %v1132
      %v1812 = vsel %vm1783, %v1779, %v1134
      %v1813 = vsel %vm1783, %v1780, %v1136
      %v1814 = vsel %vm1783, %v1781, %v1138
      %v1815 = vsel %vm1783, %v1782, %v1140
      %vm1816 = vcmask 162816
      %v1817 = vsel %vm1816, %v1784, %v1206
      %v1818 = vsel %vm1816, %v1785, %v1208
      %v1819 = vsel %vm1816, %v1786, %v1210
      %v1820 = vsel %vm1816, %v1787, %v1212
      %v1821 = vsel %vm1816, %v1788, %v1214
      %v1822 = vsel %vm1816, %v1789, %v1216
      %v1823 = vsel %vm1816, %v1790, %v1218
      %v1824 = vsel %vm1816, %v1791, %v1220
      %v1825 = vsel %vm1816, %v1792, %v1222
      %v1826 = vsel %vm1816, %v1793, %v1224
      %v1827 = vsel %vm1816, %v1794, %v1226
      %v1828 = vsel %vm1816, %v1795, %v1228
      %v1829 = vsel %vm1816, %v1796, %v1230
      %v1830 = vsel %vm1816, %v1797, %v1232
      %v1831 = vsel %vm1816, %v1798, %v1234
      %v1832 = vsel %vm1816, %v1799, %v1236
      %v1833 = vsel %vm1816, %v1800, %v1238
      %v1834 = vsel %vm1816, %v1801, %v1240
      %v1835 = vsel %vm1816, %v1802, %v1242
      %v1836 = vsel %vm1816, %v1803, %v1244
      %v1837 = vsel %vm1816, %v1804, %v1246
      %v1838 = vsel %vm1816, %v1805, %v1248
      %v1839 = vsel %vm1816, %v1806, %v1250
      %v1840 = vsel %vm1816, %v1807, %v1252
      %v1841 = vsel %vm1816, %v1808, %v1254
      %v1842 = vsel %vm1816, %v1809, %v1256
      %v1843 = vsel %vm1816, %v1810, %v1258
      %v1844 = vsel %vm1816, %v1811, %v1260
      %v1845 = vsel %vm1816, %v1812, %v1262
      %v1846 = vsel %vm1816, %v1813, %v1264
      %v1847 = vsel %vm1816, %v1814, %v1266
      %v1848 = vsel %vm1816, %v1815, %v1268
      %vm1849 = vcmask 195584
      %v1850 = vsel %vm1849, %v1817, %v1334
      %v1851 = vsel %vm1849, %v1818, %v1336
      %v1852 = vsel %vm1849, %v1819, %v1338
      %v1853 = vsel %vm1849, %v1820, %v1340
      %v1854 = vsel %vm1849, %v1821, %v1342
      %v1855 = vsel %vm1849, %v1822, %v1344
      %v1856 = vsel %vm1849, %v1823, %v1346
      %v1857 = vsel %vm1849, %v1824, %v1348
      %v1858 = vsel %vm1849, %v1825, %v1350
      %v1859 = vsel %vm1849, %v1826, %v1352
      %v1860 = vsel %vm1849, %v1827, %v1354
      %v1861 = vsel %vm1849, %v1828, %v1356
      %v1862 = vsel %vm1849, %v1829, %v1358
      %v1863 = vsel %vm1849, %v1830, %v1360
      %v1864 = vsel %vm1849, %v1831, %v1362
      %v1865 = vsel %vm1849, %v1832, %v1364
      %v1866 = vsel %vm1849, %v1833, %v1366
      %v1867 = vsel %vm1849, %v1834, %v1368
      %v1868 = vsel %vm1849, %v1835, %v1370
      %v1869 = vsel %vm1849, %v1836, %v1372
      %v1870 = vsel %vm1849, %v1837, %v1374
      %v1871 = vsel %vm1849, %v1838, %v1376
      %v1872 = vsel %vm1849, %v1839, %v1378
      %v1873 = vsel %vm1849, %v1840, %v1380
      %v1874 = vsel %vm1849, %v1841, %v1382
      %v1875 = vsel %vm1849, %v1842, %v1384
      %v1876 = vsel %vm1849, %v1843, %v1386
      %v1877 = vsel %vm1849, %v1844, %v1388
      %v1878 = vsel %vm1849, %v1845, %v1390
      %v1879 = vsel %vm1849, %v1846, %v1392
      %v1880 = vsel %vm1849, %v1847, %v1394
      %v1881 = vsel %vm1849, %v1848, %v1396
      %vm1882 = vcmask 228352
      %v1883 = vsel %vm1882, %v1850, %v1462
      %v1884 = vsel %vm1882, %v1851, %v1464
      %v1885 = vsel %vm1882, %v1852, %v1466
      %v1886 = vsel %vm1882, %v1853, %v1468
      %v1887 = vsel %vm1882, %v1854, %v1470
      %v1888 = vsel %vm1882, %v1855, %v1472
      %v1889 = vsel %vm1882, %v1856, %v1474
      %v1890 = vsel %vm1882, %v1857, %v1476
      %v1891 = vsel %vm1882, %v1858, %v1478
      %v1892 = vsel %vm1882, %v1859, %v1480
      %v1893 = vsel %vm1882, %v1860, %v1482
      %v1894 = vsel %vm1882, %v1861, %v1484
      %v1895 = vsel %vm1882, %v1862, %v1486
      %v1896 = vsel %vm1882, %v1863, %v1488
      %v1897 = vsel %vm1882, %v1864, %v1490
      %v1898 = vsel %vm1882, %v1865, %v1492
      %v1899 = vsel %vm1882, %v1866, %v1494
      %v1900 = vsel %vm1882, %v1867, %v1496
      %v1901 = vsel %vm1882, %v1868, %v1498
      %v1902 = vsel %vm1882, %v1869, %v1500
      %v1903 = vsel %vm1882, %v1870, %v1502
      %v1904 = vsel %vm1882, %v1871, %v1504
      %v1905 = vsel %vm1882, %v1872, %v1506
      %v1906 = vsel %vm1882, %v1873, %v1508
      %v1907 = vsel %vm1882, %v1874, %v1510
      %v1908 = vsel %vm1882, %v1875, %v1512
      %v1909 = vsel %vm1882, %v1876, %v1514
      %v1910 = vsel %vm1882, %v1877, %v1516
      %v1911 = vsel %vm1882, %v1878, %v1518
      %v1912 = vsel %vm1882, %v1879, %v1520
      %v1913 = vsel %vm1882, %v1880, %v1522
      %v1914 = vsel %vm1882, %v1881, %v1524
      %vm1915 = vcmask 261120
      %v1916 = vsel %vm1915, %v1883, %v1590
      %v1917 = vsel %vm1915, %v1884, %v1592
      %v1918 = vsel %vm1915, %v1885, %v1594
      %v1919 = vsel %vm1915, %v1886, %v1596
      %v1920 = vsel %vm1915, %v1887, %v1598
      %v1921 = vsel %vm1915, %v1888, %v1600
      %v1922 = vsel %vm1915, %v1889, %v1602
      %v1923 = vsel %vm1915, %v1890, %v1604
      %v1924 = vsel %vm1915, %v1891, %v1606
      %v1925 = vsel %vm1915, %v1892, %v1608
      %v1926 = vsel %vm1915, %v1893, %v1610
      %v1927 = vsel %vm1915, %v1894, %v1612
      %v1928 = vsel %vm1915, %v1895, %v1614
      %v1929 = vsel %vm1915, %v1896, %v1616
      %v1930 = vsel %vm1915, %v1897, %v1618
      %v1931 = vsel %vm1915, %v1898, %v1620
      %v1932 = vsel %vm1915, %v1899, %v1622
      %v1933 = vsel %vm1915, %v1900, %v1624
      %v1934 = vsel %vm1915, %v1901, %v1626
      %v1935 = vsel %vm1915, %v1902, %v1628
      %v1936 = vsel %vm1915, %v1903, %v1630
      %v1937 = vsel %vm1915, %v1904, %v1632
      %v1938 = vsel %vm1915, %v1905, %v1634
      %v1939 = vsel %vm1915, %v1906, %v1636
      %v1940 = vsel %vm1915, %v1907, %v1638
      %v1941 = vsel %vm1915, %v1908, %v1640
      %v1942 = vsel %vm1915, %v1909, %v1642
      %v1943 = vsel %vm1915, %v1910, %v1644
      %v1944 = vsel %vm1915, %v1911, %v1646
      %v1945 = vsel %vm1915, %v1912, %v1648
      %v1946 = vsel %vm1915, %v1913, %v1650
      %v1947 = vsel %vm1915, %v1914, %v1652
      %v1948 = vpack.c.bf16 %v1917, %v1916
      %v1949 = vpack.c.bf16 %v1919, %v1918
      %v1950 = vpack.c.bf16 %v1921, %v1920
      %v1951 = vpack.c.bf16 %v1923, %v1922
      %v1952 = vpack.c.bf16 %v1925, %v1924
      %v1953 = vpack.c.bf16 %v1927, %v1926
      %v1954 = vpack.c.bf16 %v1929, %v1928
      %v1955 = vpack.c.bf16 %v1931, %v1930
      %v1956 = vpack.c.bf16 %v1933, %v1932
      %v1957 = vpack.c.bf16 %v1935, %v1934
      %v1958 = vpack.c.bf16 %v1937, %v1936
      %v1959 = vpack.c.bf16 %v1939, %v1938
      %v1960 = vpack.c.bf16 %v1941, %v1940
      %v1961 = vpack.c.bf16 %v1943, %v1942
      %v1962 = vpack.c.bf16 %v1945, %v1944
      %v1963 = vpack.c.bf16 %v1947, %v1946
      %v1964 = vld [vmem:[%s1] sm:$0xf]
      %v1965 = vld [vmem:[%s1 + $0x4] sm:$0xf]
      %v1966 = vld [vmem:[%s1 + $0x8] sm:$0xf]
      %v1967 = vld [vmem:[%s1 + $0xc] sm:$0xf]
      %v1968 = vld [vmem:[%s1 + $0x10] sm:$0x3]
      %v1974 = vunpack.c.l.b16 %v1964
      %v1975 = vunpack.c.l.b16 %v1965
      %v1976 = vunpack.c.l.b16 %v1966
      %v1977 = vunpack.c.l.b16 %v1967
      %v1978 = vunpack.c.l.b16 %v1968
      %v1979 = vpack.c.b16 %v1975, %v1974
      %v1980 = vpack.c.b16 %v1977, %v1976
      %v1981 = vpack.c.b16 %v1978, %v1978
      %vm1984 = vcmask 293888
      %v1986 = vsel %vm1984, %v1948, 0
      %v1989 = vsel %vm1984, %v1949, 0
      %v1992 = vsel %vm1984, %v1950, 0
      %v1995 = vsel %vm1984, %v1951, 0
      %v1998 = vsel %vm1984, %v1952, 0
      %v2001 = vsel %vm1984, %v1953, 0
      %v2004 = vsel %vm1984, %v1954, 0
      %v2007 = vsel %vm1984, %v1955, 0
      %v2010 = vsel %vm1984, %v1956, 0
      %v2013 = vsel %vm1984, %v1957, 0
      %v2016 = vsel %vm1984, %v1958, 0
      %v2019 = vsel %vm1984, %v1959, 0
      %v2022 = vsel %vm1984, %v1960, 0
      %v2025 = vsel %vm1984, %v1961, 0
      %v2028 = vsel %vm1984, %v1962, 0
      %v2031 = vsel %vm1984, %v1963, 0
      %vm2033 = vcmask 1041408
      %v2035 = vsel %vm2033, %v1981, 0
      %2037 = vmatpush.bf16.msra.mxu0 0
      %2038 = vmatpush.bf16.msra.mxu0 0
      %2039 = vmatpush.bf16.msra.mxu0 0
      %2040 = vmatpush.bf16.msra.mxu0 0
      %2041 = vmatpush.bf16.msra.mxu0 0
      %2042 = vmatpush.bf16.msra.mxu0 %v2035
      %2043 = vmatpush.bf16.msra.mxu0 %v1980
      %2044 = vmatpush.bf16.msra.mxu0 %v1979
      %2045 = vmatmul.bf16.gmra.mxu0 %v1986
      %v2046 = vpop.f32.mrf.mxu0
      %v2047 = vadd.f32 0.0, %v2046
      %v2048 = vpop.f32.mrf.mxu0
      %v2049 = vadd.f32 0.0, %v2048
      %2050 = vmatmul.bf16.gmra.mxu0 %v1989
      %v2051 = vpop.f32.mrf.mxu0
      %v2052 = vadd.f32 0.0, %v2051
      %v2053 = vpop.f32.mrf.mxu0
      %v2054 = vadd.f32 0.0, %v2053
      %2055 = vmatmul.bf16.gmra.mxu0 %v1992
      %v2056 = vpop.f32.mrf.mxu0
      %v2057 = vadd.f32 0.0, %v2056
      %v2058 = vpop.f32.mrf.mxu0
      %v2059 = vadd.f32 0.0, %v2058
      %2060 = vmatmul.bf16.gmra.mxu0 %v1995
      %v2061 = vpop.f32.mrf.mxu0
      %v2062 = vadd.f32 0.0, %v2061
      %v2063 = vpop.f32.mrf.mxu0
      %v2064 = vadd.f32 0.0, %v2063
      %2065 = vmatmul.bf16.gmra.mxu0 %v1998
      %v2066 = vpop.f32.mrf.mxu0
      %v2067 = vadd.f32 0.0, %v2066
      %v2068 = vpop.f32.mrf.mxu0
      %v2069 = vadd.f32 0.0, %v2068
      %2070 = vmatmul.bf16.gmra.mxu0 %v2001
      %v2071 = vpop.f32.mrf.mxu0
      %v2072 = vadd.f32 0.0, %v2071
      %v2073 = vpop.f32.mrf.mxu0
      %v2074 = vadd.f32 0.0, %v2073
      %2075 = vmatmul.bf16.gmra.mxu0 %v2004
      %v2076 = vpop.f32.mrf.mxu0
      %v2077 = vadd.f32 0.0, %v2076
      %v2078 = vpop.f32.mrf.mxu0
      %v2079 = vadd.f32 0.0, %v2078
      %2080 = vmatmul.bf16.gmra.mxu0 %v2007
      %v2081 = vpop.f32.mrf.mxu0
      %v2082 = vadd.f32 0.0, %v2081
      %v2083 = vpop.f32.mrf.mxu0
      %v2084 = vadd.f32 0.0, %v2083
      %2085 = vmatmul.bf16.gmra.mxu0 %v2010
      %v2086 = vpop.f32.mrf.mxu0
      %v2087 = vadd.f32 0.0, %v2086
      %v2088 = vpop.f32.mrf.mxu0
      %v2089 = vadd.f32 0.0, %v2088
      %2090 = vmatmul.bf16.gmra.mxu0 %v2013
      %v2091 = vpop.f32.mrf.mxu0
      %v2092 = vadd.f32 0.0, %v2091
      %v2093 = vpop.f32.mrf.mxu0
      %v2094 = vadd.f32 0.0, %v2093
      %2095 = vmatmul.bf16.gmra.mxu0 %v2016
      %v2096 = vpop.f32.mrf.mxu0
      %v2097 = vadd.f32 0.0, %v2096
      %v2098 = vpop.f32.mrf.mxu0
      %v2099 = vadd.f32 0.0, %v2098
      %2100 = vmatmul.bf16.gmra.mxu0 %v2019
      %v2101 = vpop.f32.mrf.mxu0
      %v2102 = vadd.f32 0.0, %v2101
      %v2103 = vpop.f32.mrf.mxu0
      %v2104 = vadd.f32 0.0, %v2103
      %2105 = vmatmul.bf16.gmra.mxu0 %v2022
      %v2106 = vpop.f32.mrf.mxu0
      %v2107 = vadd.f32 0.0, %v2106
      %v2108 = vpop.f32.mrf.mxu0
      %v2109 = vadd.f32 0.0, %v2108
      %2110 = vmatmul.bf16.gmra.mxu0 %v2025
      %v2111 = vpop.f32.mrf.mxu0
      %v2112 = vadd.f32 0.0, %v2111
      %v2113 = vpop.f32.mrf.mxu0
      %v2114 = vadd.f32 0.0, %v2113
      %2115 = vmatmul.bf16.gmra.mxu0 %v2028
      %v2116 = vpop.f32.mrf.mxu0
      %v2117 = vadd.f32 0.0, %v2116
      %v2118 = vpop.f32.mrf.mxu0
      %v2119 = vadd.f32 0.0, %v2118
      %2120 = vmatmul.bf16.gmra.mxu0 %v2031
      %v2121 = vpop.f32.mrf.mxu0
      %v2122 = vadd.f32 0.0, %v2121
      %v2123 = vpop.f32.mrf.mxu0
      %v2124 = vadd.f32 0.0, %v2123
      %2125 = vdwg.mxu0
      %2126 = vst.msk [vmem:[#allocation3] sm:$0xff] %vm1717, %v2047
      %2127 = vst.msk [vmem:[#allocation3 + $0x8] sm:$0xff] %vm1717, %v2049
      %2128 = vst.msk [vmem:[#allocation3 + $0x10] sm:$0xff] %vm1717, %v2052
      %2129 = vst.msk [vmem:[#allocation3 + $0x18] sm:$0xff] %vm1717, %v2054
      %2130 = vst.msk [vmem:[#allocation3 + $0x20] sm:$0xff] %vm1717, %v2057
      %2131 = vst.msk [vmem:[#allocation3 + $0x28] sm:$0xff] %vm1717, %v2059
      %2132 = vst.msk [vmem:[#allocation3 + $0x30] sm:$0xff] %vm1717, %v2062
      %2133 = vst.msk [vmem:[#allocation3 + $0x38] sm:$0xff] %vm1717, %v2064
      %2134 = vst.msk [vmem:[#allocation3 + $0x40] sm:$0xff] %vm1717, %v2067
      %2135 = vst.msk [vmem:[#allocation3 + $0x48] sm:$0xff] %vm1717, %v2069
      %2136 = vst.msk [vmem:[#allocation3 + $0x50] sm:$0xff] %vm1717, %v2072
      %2137 = vst.msk [vmem:[#allocation3 + $0x58] sm:$0xff] %vm1717, %v2074
      %2138 = vst.msk [vmem:[#allocation3 + $0x60] sm:$0xff] %vm1717, %v2077
      %2139 = vst.msk [vmem:[#allocation3 + $0x68] sm:$0xff] %vm1717, %v2079
      %2140 = vst.msk [vmem:[#allocation3 + $0x70] sm:$0xff] %vm1717, %v2082
      %2141 = vst.msk [vmem:[#allocation3 + $0x78] sm:$0xff] %vm1717, %v2084
      %2142 = vst.msk [vmem:[#allocation3 + $0x80] sm:$0xff] %vm1717, %v2087
      %2143 = vst.msk [vmem:[#allocation3 + $0x88] sm:$0xff] %vm1717, %v2089
      %2144 = vst.msk [vmem:[#allocation3 + $0x90] sm:$0xff] %vm1717, %v2092
      %2145 = vst.msk [vmem:[#allocation3 + $0x98] sm:$0xff] %vm1717, %v2094
      %2146 = vst.msk [vmem:[#allocation3 + $0xa0] sm:$0xff] %vm1717, %v2097
      %2147 = vst.msk [vmem:[#allocation3 + $0xa8] sm:$0xff] %vm1717, %v2099
      %2148 = vst.msk [vmem:[#allocation3 + $0xb0] sm:$0xff] %vm1717, %v2102
      %2149 = vst.msk [vmem:[#allocation3 + $0xb8] sm:$0xff] %vm1717, %v2104
      %2150 = vst.msk [vmem:[#allocation3 + $0xc0] sm:$0xff] %vm1717, %v2107
      %2151 = vst.msk [vmem:[#allocation3 + $0xc8] sm:$0xff] %vm1717, %v2109
      %2152 = vst.msk [vmem:[#allocation3 + $0xd0] sm:$0xff] %vm1717, %v2112
      %2153 = vst.msk [vmem:[#allocation3 + $0xd8] sm:$0xff] %vm1717, %v2114
      %2154 = vst.msk [vmem:[#allocation3 + $0xe0] sm:$0xff] %vm1717, %v2117
      %2155 = vst.msk [vmem:[#allocation3 + $0xe8] sm:$0xff] %vm1717, %v2119
      %2156 = vst.msk [vmem:[#allocation3 + $0xf0] sm:$0xff] %vm1717, %v2122
      %2157 = vst.msk [vmem:[#allocation3 + $0xf8] sm:$0xff] %vm1717, %v2124
      %v2158 = vld [vmem:[#allocation3] sm:$0xff]
      %v2159 = vld [vmem:[#allocation3 + $0x8] sm:$0xff]
      %v2160 = vld [vmem:[#allocation3 + $0x10] sm:$0xff]
      %v2161 = vld [vmem:[#allocation3 + $0x18] sm:$0xff]
      %v2162 = vld [vmem:[#allocation3 + $0x20] sm:$0xff]
      %v2163 = vld [vmem:[#allocation3 + $0x28] sm:$0xff]
      %v2164 = vld [vmem:[#allocation3 + $0x30] sm:$0xff]
      %v2165 = vld [vmem:[#allocation3 + $0x38] sm:$0xff]
      %v2166 = vld [vmem:[#allocation3 + $0x40] sm:$0xff]
      %v2167 = vld [vmem:[#allocation3 + $0x48] sm:$0xff]
      %v2168 = vld [vmem:[#allocation3 + $0x50] sm:$0xff]
      %v2169 = vld [vmem:[#allocation3 + $0x58] sm:$0xff]
      %v2170 = vld [vmem:[#allocation3 + $0x60] sm:$0xff]
      %v2171 = vld [vmem:[#allocation3 + $0x68] sm:$0xff]
      %v2172 = vld [vmem:[#allocation3 + $0x70] sm:$0xff]
      %v2173 = vld [vmem:[#allocation3 + $0x78] sm:$0xff]
      %v2174 = vld [vmem:[#allocation3 + $0x80] sm:$0xff]
      %v2175 = vld [vmem:[#allocation3 + $0x88] sm:$0xff]
      %v2176 = vld [vmem:[#allocation3 + $0x90] sm:$0xff]
      %v2177 = vld [vmem:[#allocation3 + $0x98] sm:$0xff]
      %v2178 = vld [vmem:[#allocation3 + $0xa0] sm:$0xff]
      %v2179 = vld [vmem:[#allocation3 + $0xa8] sm:$0xff]
      %v2180 = vld [vmem:[#allocation3 + $0xb0] sm:$0xff]
      %v2181 = vld [vmem:[#allocation3 + $0xb8] sm:$0xff]
      %v2182 = vld [vmem:[#allocation3 + $0xc0] sm:$0xff]
      %v2183 = vld [vmem:[#allocation3 + $0xc8] sm:$0xff]
      %v2184 = vld [vmem:[#allocation3 + $0xd0] sm:$0xff]
      %v2185 = vld [vmem:[#allocation3 + $0xd8] sm:$0xff]
      %v2186 = vld [vmem:[#allocation3 + $0xe0] sm:$0xff]
      %v2187 = vld [vmem:[#allocation3 + $0xe8] sm:$0xff]
      %v2188 = vld [vmem:[#allocation3 + $0xf0] sm:$0xff]
      %v2189 = vld [vmem:[#allocation3 + $0xf8] sm:$0xff]
      %v2190 = vsel %vm1717, %v2158, 0.0
      %v2191 = vsel %vm1717, %v2159, 0.0
      %v2192 = vadd.f32 %v2190, %v2191
      %v2193 = vsel %vm1717, %v2160, 0.0
      %v2194 = vadd.f32 %v2192, %v2193
      %v2195 = vsel %vm1717, %v2161, 0.0
      %v2196 = vadd.f32 %v2194, %v2195
      %v2197 = vsel %vm1717, %v2162, 0.0
      %v2198 = vadd.f32 %v2196, %v2197
      %v2199 = vsel %vm1717, %v2163, 0.0
      %v2200 = vadd.f32 %v2198, %v2199
      %v2201 = vsel %vm1717, %v2164, 0.0
      %v2202 = vadd.f32 %v2200, %v2201
      %v2203 = vsel %vm1717, %v2165, 0.0
      %v2204 = vadd.f32 %v2202, %v2203
      %v2205 = vsel %vm1717, %v2166, 0.0
      %v2206 = vadd.f32 %v2204, %v2205
      %v2207 = vsel %vm1717, %v2167, 0.0
      %v2208 = vadd.f32 %v2206, %v2207
      %v2209 = vsel %vm1717, %v2168, 0.0
      %v2210 = vadd.f32 %v2208, %v2209
      %v2211 = vsel %vm1717, %v2169, 0.0
      %v2212 = vadd.f32 %v2210, %v2211
      %v2213 = vsel %vm1717, %v2170, 0.0
      %v2214 = vadd.f32 %v2212, %v2213
      %v2215 = vsel %vm1717, %v2171, 0.0
      %v2216 = vadd.f32 %v2214, %v2215
      %v2217 = vsel %vm1717, %v2172, 0.0
      %v2218 = vadd.f32 %v2216, %v2217
      %v2219 = vsel %vm1717, %v2173, 0.0
      %v2220 = vadd.f32 %v2218, %v2219
      %v2221 = vsel %vm1717, %v2174, 0.0
      %v2222 = vadd.f32 %v2220, %v2221
      %v2223 = vsel %vm1717, %v2175, 0.0
      %v2224 = vadd.f32 %v2222, %v2223
      %v2225 = vsel %vm1717, %v2176, 0.0
      %v2226 = vadd.f32 %v2224, %v2225
      %v2227 = vsel %vm1717, %v2177, 0.0
      %v2228 = vadd.f32 %v2226, %v2227
      %v2229 = vsel %vm1717, %v2178, 0.0
      %v2230 = vadd.f32 %v2228, %v2229
      %v2231 = vsel %vm1717, %v2179, 0.0
      %v2232 = vadd.f32 %v2230, %v2231
      %v2233 = vsel %vm1717, %v2180, 0.0
      %v2234 = vadd.f32 %v2232, %v2233
      %v2235 = vsel %vm1717, %v2181, 0.0
      %v2236 = vadd.f32 %v2234, %v2235
      %v2237 = vsel %vm1717, %v2182, 0.0
      %v2238 = vadd.f32 %v2236, %v2237
      %v2239 = vsel %vm1717, %v2183, 0.0
      %v2240 = vadd.f32 %v2238, %v2239
      %v2241 = vsel %vm1717, %v2184, 0.0
      %v2242 = vadd.f32 %v2240, %v2241
      %v2243 = vsel %vm1717, %v2185, 0.0
      %v2244 = vadd.f32 %v2242, %v2243
      %v2245 = vsel %vm1717, %v2186, 0.0
      %v2246 = vadd.f32 %v2244, %v2245
      %v2247 = vsel %vm1717, %v2187, 0.0
      %v2248 = vadd.f32 %v2246, %v2247
      %v2249 = vsel %vm1717, %v2188, 0.0
      %v2250 = vadd.f32 %v2248, %v2249
      %v2251 = vsel %vm1717, %v2189, 0.0
      %v2252 = vadd.f32 %v2250, %v2251
      %v2253 = vrot.slane %v2252, 4
      %v2254 = vadd.f32 %v2252, %v2253
      %v2255 = vrot.slane %v2254, 2
      %v2256 = vadd.f32 %v2254, %v2255
      %v2257 = vrot.slane %v2256, 1
      %v2258 = vadd.f32 %v2256, %v2257
      %v2259 = vrcp.pop 256.0
      %v2260 = vmul.f32 256.0, %v2259
      %v2261 = vsub.f32 1.0, %v2260
      %v2262 = vmul.f32 %v2259, %v2261
      %v2263 = vadd.f32 %v2259, %v2262
      %vm2264 = vweird.f32 %v2259
      %v2265 = vsel %vm2264, %v2259, %v2263
      %v2266 = vmul.f32 %v2258, %v2265
      %v2267 = vsub.f32 %v2158, %v2266
      %v2268 = vsub.f32 %v2159, %v2266
      %v2269 = vsub.f32 %v2160, %v2266
      %v2270 = vsub.f32 %v2161, %v2266
      %v2271 = vsub.f32 %v2162, %v2266
      %v2272 = vsub.f32 %v2163, %v2266
      %v2273 = vsub.f32 %v2164, %v2266
      %v2274 = vsub.f32 %v2165, %v2266
      %v2275 = vsub.f32 %v2166, %v2266
      %v2276 = vsub.f32 %v2167, %v2266
      %v2277 = vsub.f32 %v2168, %v2266
      %v2278 = vsub.f32 %v2169, %v2266
      %v2279 = vsub.f32 %v2170, %v2266
      %v2280 = vsub.f32 %v2171, %v2266
      %v2281 = vsub.f32 %v2172, %v2266
      %v2282 = vsub.f32 %v2173, %v2266
      %v2283 = vsub.f32 %v2174, %v2266
      %v2284 = vsub.f32 %v2175, %v2266
      %v2285 = vsub.f32 %v2176, %v2266
      %v2286 = vsub.f32 %v2177, %v2266
      %v2287 = vsub.f32 %v2178, %v2266
      %v2288 = vsub.f32 %v2179, %v2266
      %v2289 = vsub.f32 %v2180, %v2266
      %v2290 = vsub.f32 %v2181, %v2266
      %v2291 = vsub.f32 %v2182, %v2266
      %v2292 = vsub.f32 %v2183, %v2266
      %v2293 = vsub.f32 %v2184, %v2266
      %v2294 = vsub.f32 %v2185, %v2266
      %v2295 = vsub.f32 %v2186, %v2266
      %v2296 = vsub.f32 %v2187, %v2266
      %v2297 = vsub.f32 %v2188, %v2266
      %v2298 = vsub.f32 %v2189, %v2266
      %v2299 = vmul.f32 %v2267, %v2267
      %v2300 = vmul.f32 %v2268, %v2268
      %v2301 = vmul.f32 %v2269, %v2269
      %v2302 = vmul.f32 %v2270, %v2270
      %v2303 = vmul.f32 %v2271, %v2271
      %v2304 = vmul.f32 %v2272, %v2272
      %v2305 = vmul.f32 %v2273, %v2273
      %v2306 = vmul.f32 %v2274, %v2274
      %v2307 = vmul.f32 %v2275, %v2275
      %v2308 = vmul.f32 %v2276, %v2276
      %v2309 = vmul.f32 %v2277, %v2277
      %v2310 = vmul.f32 %v2278, %v2278
      %v2311 = vmul.f32 %v2279, %v2279
      %v2312 = vmul.f32 %v2280, %v2280
      %v2313 = vmul.f32 %v2281, %v2281
      %v2314 = vmul.f32 %v2282, %v2282
      %v2315 = vmul.f32 %v2283, %v2283
      %v2316 = vmul.f32 %v2284, %v2284
      %v2317 = vmul.f32 %v2285, %v2285
      %v2318 = vmul.f32 %v2286, %v2286
      %v2319 = vmul.f32 %v2287, %v2287
      %v2320 = vmul.f32 %v2288, %v2288
      %v2321 = vmul.f32 %v2289, %v2289
      %v2322 = vmul.f32 %v2290, %v2290
      %v2323 = vmul.f32 %v2291, %v2291
      %v2324 = vmul.f32 %v2292, %v2292
      %v2325 = vmul.f32 %v2293, %v2293
      %v2326 = vmul.f32 %v2294, %v2294
      %v2327 = vmul.f32 %v2295, %v2295
      %v2328 = vmul.f32 %v2296, %v2296
      %v2329 = vmul.f32 %v2297, %v2297
      %v2330 = vmul.f32 %v2298, %v2298
      %v2331 = vsel %vm1717, %v2299, 0.0
      %v2332 = vsel %vm1717, %v2300, 0.0
      %v2333 = vadd.f32 %v2331, %v2332
      %v2334 = vsel %vm1717, %v2301, 0.0
      %v2335 = vadd.f32 %v2333, %v2334
      %v2336 = vsel %vm1717, %v2302, 0.0
      %v2337 = vadd.f32 %v2335, %v2336
      %v2338 = vsel %vm1717, %v2303, 0.0
      %v2339 = vadd.f32 %v2337, %v2338
      %v2340 = vsel %vm1717, %v2304, 0.0
      %v2341 = vadd.f32 %v2339, %v2340
      %v2342 = vsel %vm1717, %v2305, 0.0
      %v2343 = vadd.f32 %v2341, %v2342
      %v2344 = vsel %vm1717, %v2306, 0.0
      %v2345 = vadd.f32 %v2343, %v2344
      %v2346 = vsel %vm1717, %v2307, 0.0
      %v2347 = vadd.f32 %v2345, %v2346
      %v2348 = vsel %vm1717, %v2308, 0.0
      %v2349 = vadd.f32 %v2347, %v2348
      %v2350 = vsel %vm1717, %v2309, 0.0
      %v2351 = vadd.f32 %v2349, %v2350
      %v2352 = vsel %vm1717, %v2310, 0.0
      %v2353 = vadd.f32 %v2351, %v2352
      %v2354 = vsel %vm1717, %v2311, 0.0
      %v2355 = vadd.f32 %v2353, %v2354
      %v2356 = vsel %vm1717, %v2312, 0.0
      %v2357 = vadd.f32 %v2355, %v2356
      %v2358 = vsel %vm1717, %v2313, 0.0
      %v2359 = vadd.f32 %v2357, %v2358
      %v2360 = vsel %vm1717, %v2314, 0.0
      %v2361 = vadd.f32 %v2359, %v2360
      %v2362 = vsel %vm1717, %v2315, 0.0
      %v2363 = vadd.f32 %v2361, %v2362
      %v2364 = vsel %vm1717, %v2316, 0.0
      %v2365 = vadd.f32 %v2363, %v2364
      %v2366 = vsel %vm1717, %v2317, 0.0
      %v2367 = vadd.f32 %v2365, %v2366
      %v2368 = vsel %vm1717, %v2318, 0.0
      %v2369 = vadd.f32 %v2367, %v2368
      %v2370 = vsel %vm1717, %v2319, 0.0
      %v2371 = vadd.f32 %v2369, %v2370
      %v2372 = vsel %vm1717, %v2320, 0.0
      %v2373 = vadd.f32 %v2371, %v2372
      %v2374 = vsel %vm1717, %v2321, 0.0
      %v2375 = vadd.f32 %v2373, %v2374
      %v2376 = vsel %vm1717, %v2322, 0.0
      %v2377 = vadd.f32 %v2375, %v2376
      %v2378 = vsel %vm1717, %v2323, 0.0
      %v2379 = vadd.f32 %v2377, %v2378
      %v2380 = vsel %vm1717, %v2324, 0.0
      %v2381 = vadd.f32 %v2379, %v2380
      %v2382 = vsel %vm1717, %v2325, 0.0
      %v2383 = vadd.f32 %v2381, %v2382
      %v2384 = vsel %vm1717, %v2326, 0.0
      %v2385 = vadd.f32 %v2383, %v2384
      %v2386 = vsel %vm1717, %v2327, 0.0
      %v2387 = vadd.f32 %v2385, %v2386
      %v2388 = vsel %vm1717, %v2328, 0.0
      %v2389 = vadd.f32 %v2387, %v2388
      %v2390 = vsel %vm1717, %v2329, 0.0
      %v2391 = vadd.f32 %v2389, %v2390
      %v2392 = vsel %vm1717, %v2330, 0.0
      %v2393 = vadd.f32 %v2391, %v2392
      %v2394 = vrot.slane %v2393, 4
      %v2395 = vadd.f32 %v2393, %v2394
      %v2396 = vrot.slane %v2395, 2
      %v2397 = vadd.f32 %v2395, %v2396
      %v2398 = vrot.slane %v2397, 1
      %v2399 = vadd.f32 %v2397, %v2398
      %v2400 = vmul.f32 %v2399, %v2265
      %v2401 = vadd.f32 %v2400, 1e-05
      %v2402 = vrsqrt.pop %v2401
      %v2403 = vmul.f32 %v2402, %v2401
      %v2404 = vmul.f32 %v2403, %v2402
      %v2405 = vmul.f32 0.5, %v2404
      %v2406 = vsub.f32 1.5, %v2405
      %v2407 = vmul.f32 %v2402, %v2406
      %vm2408 = vweird.f32 %v2401
      %vm2409 = vweird.f32 %v2402
      %vm2410 = vmor %vm2408, %vm2409
      %v2411 = vsel %vm2410, %v2402, %v2407
      %v2412 = vmul.f32 %v2267, %v2411
      %v2413 = vmul.f32 %v2268, %v2411
      %v2414 = vmul.f32 %v2269, %v2411
      %v2415 = vmul.f32 %v2270, %v2411
      %v2416 = vmul.f32 %v2271, %v2411
      %v2417 = vmul.f32 %v2272, %v2411
      %v2418 = vmul.f32 %v2273, %v2411
      %v2419 = vmul.f32 %v2274, %v2411
      %v2420 = vmul.f32 %v2275, %v2411
      %v2421 = vmul.f32 %v2276, %v2411
      %v2422 = vmul.f32 %v2277, %v2411
      %v2423 = vmul.f32 %v2278, %v2411
      %v2424 = vmul.f32 %v2279, %v2411
      %v2425 = vmul.f32 %v2280, %v2411
      %v2426 = vmul.f32 %v2281, %v2411
      %v2427 = vmul.f32 %v2282, %v2411
      %v2428 = vmul.f32 %v2283, %v2411
      %v2429 = vmul.f32 %v2284, %v2411
      %v2430 = vmul.f32 %v2285, %v2411
      %v2431 = vmul.f32 %v2286, %v2411
      %v2432 = vmul.f32 %v2287, %v2411
      %v2433 = vmul.f32 %v2288, %v2411
      %v2434 = vmul.f32 %v2289, %v2411
      %v2435 = vmul.f32 %v2290, %v2411
      %v2436 = vmul.f32 %v2291, %v2411
      %v2437 = vmul.f32 %v2292, %v2411
      %v2438 = vmul.f32 %v2293, %v2411
      %v2439 = vmul.f32 %v2294, %v2411
      %v2440 = vmul.f32 %v2295, %v2411
      %v2441 = vmul.f32 %v2296, %v2411
      %v2442 = vmul.f32 %v2297, %v2411
      %v2443 = vmul.f32 %v2298, %v2411
      %v2444 = vmax.f32 %v2412, 0.0
      %v2445 = vmax.f32 %v2413, 0.0
      %v2446 = vmax.f32 %v2414, 0.0
      %v2447 = vmax.f32 %v2415, 0.0
      %v2448 = vmax.f32 %v2416, 0.0
      %v2449 = vmax.f32 %v2417, 0.0
      %v2450 = vmax.f32 %v2418, 0.0
      %v2451 = vmax.f32 %v2419, 0.0
      %v2452 = vmax.f32 %v2420, 0.0
      %v2453 = vmax.f32 %v2421, 0.0
      %v2454 = vmax.f32 %v2422, 0.0
      %v2455 = vmax.f32 %v2423, 0.0
      %v2456 = vmax.f32 %v2424, 0.0
      %v2457 = vmax.f32 %v2425, 0.0
      %v2458 = vmax.f32 %v2426, 0.0
      %v2459 = vmax.f32 %v2427, 0.0
      %v2460 = vmax.f32 %v2428, 0.0
      %v2461 = vmax.f32 %v2429, 0.0
      %v2462 = vmax.f32 %v2430, 0.0
      %v2463 = vmax.f32 %v2431, 0.0
      %v2464 = vmax.f32 %v2432, 0.0
      %v2465 = vmax.f32 %v2433, 0.0
      %v2466 = vmax.f32 %v2434, 0.0
      %v2467 = vmax.f32 %v2435, 0.0
      %v2468 = vmax.f32 %v2436, 0.0
      %v2469 = vmax.f32 %v2437, 0.0
      %v2470 = vmax.f32 %v2438, 0.0
      %v2471 = vmax.f32 %v2439, 0.0
      %v2472 = vmax.f32 %v2440, 0.0
      %v2473 = vmax.f32 %v2441, 0.0
      %v2474 = vmax.f32 %v2442, 0.0
      %v2475 = vmax.f32 %v2443, 0.0
      %v2476 = vpack.c.bf16 %v2444, %v2444
      %v2477 = vpack.c.bf16 %v2445, %v2445
      %v2478 = vpack.c.bf16 %v2446, %v2446
      %v2479 = vpack.c.bf16 %v2447, %v2447
      %v2480 = vpack.c.bf16 %v2448, %v2448
      %v2481 = vpack.c.bf16 %v2449, %v2449
      %v2482 = vpack.c.bf16 %v2450, %v2450
      %v2483 = vpack.c.bf16 %v2451, %v2451
      %v2484 = vpack.c.bf16 %v2452, %v2452
      %v2485 = vpack.c.bf16 %v2453, %v2453
      %v2486 = vpack.c.bf16 %v2454, %v2454
      %v2487 = vpack.c.bf16 %v2455, %v2455
      %v2488 = vpack.c.bf16 %v2456, %v2456
      %v2489 = vpack.c.bf16 %v2457, %v2457
      %v2490 = vpack.c.bf16 %v2458, %v2458
      %v2491 = vpack.c.bf16 %v2459, %v2459
      %v2492 = vpack.c.bf16 %v2460, %v2460
      %v2493 = vpack.c.bf16 %v2461, %v2461
      %v2494 = vpack.c.bf16 %v2462, %v2462
      %v2495 = vpack.c.bf16 %v2463, %v2463
      %v2496 = vpack.c.bf16 %v2464, %v2464
      %v2497 = vpack.c.bf16 %v2465, %v2465
      %v2498 = vpack.c.bf16 %v2466, %v2466
      %v2499 = vpack.c.bf16 %v2467, %v2467
      %v2500 = vpack.c.bf16 %v2468, %v2468
      %v2501 = vpack.c.bf16 %v2469, %v2469
      %v2502 = vpack.c.bf16 %v2470, %v2470
      %v2503 = vpack.c.bf16 %v2471, %v2471
      %v2504 = vpack.c.bf16 %v2472, %v2472
      %v2505 = vpack.c.bf16 %v2473, %v2473
      %v2506 = vpack.c.bf16 %v2474, %v2474
      %v2507 = vpack.c.bf16 %v2475, %v2475
      %vm2508 = vcmask 60416
      %2509 = vst.msk [vmem:[%s143] sm:$0xf] %vm2508, %v2476
      %2510 = vst.msk [vmem:[%s143 + $0x4] sm:$0xf] %vm2508, %v2477
      %2511 = vst.msk [vmem:[%s143 + $0x8] sm:$0xf] %vm2508, %v2478
      %2512 = vst.msk [vmem:[%s143 + $0xc] sm:$0xf] %vm2508, %v2479
      %2513 = vst.msk [vmem:[%s143 + $0x10] sm:$0xf] %vm2508, %v2480
      %2514 = vst.msk [vmem:[%s143 + $0x14] sm:$0xf] %vm2508, %v2481
      %2515 = vst.msk [vmem:[%s143 + $0x18] sm:$0xf] %vm2508, %v2482
      %2516 = vst.msk [vmem:[%s143 + $0x1c] sm:$0xf] %vm2508, %v2483
      %2517 = vst.msk [vmem:[%s143 + $0x20] sm:$0xf] %vm2508, %v2484
      %2518 = vst.msk [vmem:[%s143 + $0x24] sm:$0xf] %vm2508, %v2485
      %2519 = vst.msk [vmem:[%s143 + $0x28] sm:$0xf] %vm2508, %v2486
      %2520 = vst.msk [vmem:[%s143 + $0x2c] sm:$0xf] %vm2508, %v2487
      %2521 = vst.msk [vmem:[%s143 + $0x30] sm:$0xf] %vm2508, %v2488
      %2522 = vst.msk [vmem:[%s143 + $0x34] sm:$0xf] %vm2508, %v2489
      %2523 = vst.msk [vmem:[%s143 + $0x38] sm:$0xf] %vm2508, %v2490
      %2524 = vst.msk [vmem:[%s143 + $0x3c] sm:$0xf] %vm2508, %v2491
      %2525 = vst.msk [vmem:[%s143 + $0x40] sm:$0xf] %vm2508, %v2492
      %2526 = vst.msk [vmem:[%s143 + $0x44] sm:$0xf] %vm2508, %v2493
      %2527 = vst.msk [vmem:[%s143 + $0x48] sm:$0xf] %vm2508, %v2494
      %2528 = vst.msk [vmem:[%s143 + $0x4c] sm:$0xf] %vm2508, %v2495
      %2529 = vst.msk [vmem:[%s143 + $0x50] sm:$0xf] %vm2508, %v2496
      %2530 = vst.msk [vmem:[%s143 + $0x54] sm:$0xf] %vm2508, %v2497
      %2531 = vst.msk [vmem:[%s143 + $0x58] sm:$0xf] %vm2508, %v2498
      %2532 = vst.msk [vmem:[%s143 + $0x5c] sm:$0xf] %vm2508, %v2499
      %2533 = vst.msk [vmem:[%s143 + $0x60] sm:$0xf] %vm2508, %v2500
      %2534 = vst.msk [vmem:[%s143 + $0x64] sm:$0xf] %vm2508, %v2501
      %2535 = vst.msk [vmem:[%s143 + $0x68] sm:$0xf] %vm2508, %v2502
      %2536 = vst.msk [vmem:[%s143 + $0x6c] sm:$0xf] %vm2508, %v2503
      %2537 = vst.msk [vmem:[%s143 + $0x70] sm:$0xf] %vm2508, %v2504
      %2538 = vst.msk [vmem:[%s143 + $0x74] sm:$0xf] %vm2508, %v2505
      %2539 = vst.msk [vmem:[%s143 + $0x78] sm:$0xf] %vm2508, %v2506
      %2540 = vst.msk [vmem:[%s143 + $0x7c] sm:$0xf] %vm2508, %v2507
      %p2541 = scmp.lt.s32.totalorder %s13, 1
      %s2542 = scalar_select %p2541, %s13, 1
      %s2543 = smul.addr %s2542, 32
      %s2544 = smul.addr %s2543, 4
      %s2545 = scalar_lea.vmem %s2, %s2544
      // Predicated region
      $region29: #{tpu_custom_call.1} parent=27 // pred_check
        %p2546 = pneg %p78
      $region30: #{tpu_custom_call.1} parent=27 // pred_check_branch
        %2548 = sbr.rel (%p2546) target = $region32
      $region31: #{tpu_custom_call.1} parent=27 // pred_region
        _
      $region32: #{tpu_custom_call.1} parent=27 // pred_fallthru
        _
    $region28: #{tpu_custom_call.1} parent=5 // pred_fallthru
      _
    %p2549 = scmp.le.s32.totalorder 2, %s8
    // Predicated region
    $region33: #{tpu_custom_call.1} parent=5 // pred_check
      %p2550 = pneg %p2549
    $region34: #{tpu_custom_call.1} parent=5 // pred_check_branch
      %2552 = sbr.rel (%p2550) target = $region36
    $region35: #{tpu_custom_call.1} parent=5 // pred_region
      %s2553 = ssub.s32 %s8, 2
      // Predicated region
      $region37: #{tpu_custom_call.1} parent=35 // pred_check
        %p2554 = pneg %p84
      $region38: #{tpu_custom_call.1} parent=35 // pred_check_branch
        %2556 = sbr.rel (%p2554) target = $region40
      $region39: #{tpu_custom_call.1} parent=35 // pred_region
        %p2557 = scmp.lt.s32.totalorder %s14, 1
        %s2558 = scalar_select %p2557, %s14, 1
        %s2559 = smul.addr %s2558, 32
        %s2560 = smul.addr %s2559, 4
        %s2561 = scalar_lea.vmem %s2, %s2560
      $region40: #{tpu_custom_call.1} parent=35 // pred_fallthru
        _
    $region36: #{tpu_custom_call.1} parent=5 // pred_fallthru
      _
  $region6: #{tpu_custom_call.1} parent=0 // loop_footer
    %s12 = sadd.s32 1, %s8
  $region7: #{tpu_custom_call.1} parent=0 // loop_footer_branch
    %7 = sbr.rel target = $region3
  $region8: #{tpu_custom_call.1} parent=0 // loop_exit
    _

</llo_original>
